<compile_context>
chip_gen: v7x
topology: tpu7x:2x2x1
jax: 0.10.0
libtpu: 0.0.40
codegen_flags: <defaults>
</compile_context>

<pallas_src>
import functools

import jax
import jax.numpy as jnp
from jax import lax
from jax.experimental import pallas as pl
from jax.experimental.pallas import tpu as pltpu


def _round_up(n, m):
    return -(-n // m) * m


def dnn_kernel(x_ref, w1_ref, b1_ref, w2_ref, b2_ref, w3_ref, b3_ref, out_ref,
               *, precision):
    # One (TB, D) batch tile per grid step; the whole fc1->relu->fc2->relu->fc3
    # chain runs on that VMEM-resident tile.
    x = x_ref[...]                                               # (TB, D), native dtype

    # fc1 + ReLU (dropout = identity in eval mode). f32 accumulation on MXU.
    h1 = jnp.dot(x, w1_ref[...], preferred_element_type=jnp.float32,
                 precision=precision) + b1_ref[...]
    h1 = jnp.maximum(h1, 0.0)

    # fc2 + ReLU (dropout = identity in eval mode). Tiny (4->2): kept fused.
    h2 = jnp.dot(h1, w2_ref[...], preferred_element_type=jnp.float32,
                 precision=precision) + b2_ref[...]
    h2 = jnp.maximum(h2, 0.0)

    # fc3 (logits, no activation). Tiny (2->2): kept fused.
    out = jnp.dot(h2, w3_ref[...], preferred_element_type=jnp.float32,
                  precision=precision) + b3_ref[...]
    out_ref[...] = out.astype(out_ref.dtype)


def dnn_forward(x, params, *, tile_batch=None, precision=lax.Precision.HIGHEST):
    """x: (batch, *) -- flattened to (batch, input_dims) like x.view(N, -1).

    x is used in its native dtype (pass bf16 to halve HBM traffic).
    tile_batch: optional manual rows-per-grid-step override (rounded to 8);
    by default the tile is sized by bytes (~2 MiB of x per step).
    """
    batch = x.shape[0]
    x2d = x.reshape(batch, -1)            # view/bitcast for contiguous x; no dtype cast
    d = x2d.shape[1]
    w1, b1, w2, b2, w3, b3 = params
    x_item = x2d.dtype.itemsize
    row_bytes = max(d * x_item, 1)

    # ---- batch-tile sizing (by bytes, not rows) -----------------------------
    if tile_batch is None:
        TARGET_TILE_BYTES = 2 << 20       # ~2 MiB of x per grid step
        MAX_TILE_X_BYTES = 8 << 20        # double-buffered x <= 16 MiB (all gens)
        tb = min(TARGET_TILE_BYTES // row_bytes, MAX_TILE_X_BYTES // row_bytes)
        tb = max(8, (tb // 8) * 8)
        if batch >= 16:
            # Keep >= 2 grid steps so v7x's second TensorCore gets work.
            tb = min(tb, _round_up(pl.cdiv(batch, 2), 8))
    else:
        tb = max(8, _round_up(int(tile_batch), 8))
    tb = min(tb, _round_up(batch, 8))

    grid = (pl.cdiv(batch, tb),)          # partial last block handled by Pallas

    # ---- explicit VMEM budget (double-buffered x dominates) -----------------
    d_lanes = _round_up(d, 128)
    tile_x_vmem = tb * d_lanes * x_item
    w1_vmem = _round_up(d, 8) * 128 * w1.dtype.itemsize   # (D,4) pads to 128 lanes
    out_vmem = tb * 128 * 4                               # (tb,2) pads to 128 lanes
    small = 64 << 10                                      # biases / tiny weights
    vmem_needed = 2 * tile_x_vmem + 2 * w1_vmem + 2 * out_vmem + small + (4 << 20)
    vmem_limit = int(min(max(vmem_needed, 16 << 20), 48 << 20))

    # Advisory cost estimate: dominated by reading x and the fc1 matmul.
    flops = 2 * batch * (d * 4 + 4 * 2 + 2 * 2)
    weight_bytes = sum(int(p.size) * p.dtype.itemsize for p in params)
    bytes_accessed = batch * d * x_item + batch * 2 * 4 + weight_bytes

    kernel = functools.partial(dnn_kernel, precision=precision)

    out = pl.pallas_call(
        kernel,
        out_shape=jax.ShapeDtypeStruct((batch, 2), jnp.float32),
        grid=grid,
        in_specs=[
            # x: tiled along batch -> double-buffered HBM->VMEM pipeline.
            pl.BlockSpec((tb, d), lambda i: (i, 0)),
            # Weights/biases: constant block index -> fetched once, stay
            # VMEM-resident across all batch tiles.
            pl.BlockSpec((d, 4), lambda i: (0, 0)),
            pl.BlockSpec((1, 4), lambda i: (0, 0)),
            pl.BlockSpec((4, 2), lambda i: (0, 0)),
            pl.BlockSpec((1, 2), lambda i: (0, 0)),
            pl.BlockSpec((2, 2), lambda i: (0, 0)),
            pl.BlockSpec((1, 2), lambda i: (0, 0)),
        ],
        out_specs=pl.BlockSpec((tb, 2), lambda i: (i, 0)),
        compiler_params=pltpu.CompilerParams(
            # Batch tiles are independent: shard across TCs on v7x megacore.
            dimension_semantics=("parallel",),
            vmem_limit_bytes=vmem_limit,
        ),
        cost_estimate=pl.CostEstimate(
            flops=flops, transcendentals=0, bytes_accessed=bytes_accessed),
    )(x2d, w1, b1, w2, b2, w3, b3)

    return out


def init_params(key, input_dims):
    """Deterministic init mimicking nn.Linear (uniform +-1/sqrt(fan_in)).
    Weights stored as (in_features, out_features); biases as (1, out)."""
    def linear(key, fan_in, fan_out):
        kw, kb = jax.random.split(key)
        bound = 1.0 / jnp.sqrt(jnp.float32(fan_in))
        w = jax.random.uniform(kw, (fan_in, fan_out), jnp.float32, -bound, bound)
        b = jax.random.uniform(kb, (1, fan_out), jnp.float32, -bound, bound)
        return w, b

    k1, k2, k3 = jax.random.split(key, 3)
    w1, b1 = linear(k1, input_dims, 4)
    w2, b2 = linear(k2, 4, 2)
    w3, b3 = linear(k3, 2, 2)
    return (w1, b1, w2, b2, w3, b3)


def dnn_reference(x, params, precision=lax.Precision.HIGHEST):
    """Pure-JAX reference for correctness check (eval-mode dropout)."""
    w1, b1, w2, b2, w3, b3 = params
    x2d = x.reshape(x.shape[0], -1).astype(jnp.float32)
    h1 = jnp.maximum(jnp.dot(x2d, w1, precision=precision) + b1, 0.0)
    h2 = jnp.maximum(jnp.dot(h1, w2, precision=precision) + b2, 0.0)
    return jnp.dot(h2, w3, precision=precision) + b3


if __name__ == "__main__":
    key = jax.random.PRNGKey(0)
    kx, kp = jax.random.split(key)

    batch, input_dims = 8, 32
    x = jax.random.normal(kx, (batch, input_dims), jnp.float32)
    params = init_params(kp, input_dims)

    out = jax.block_until_ready(dnn_forward(x, params))
    ref = dnn_reference(x, params)
    assert out.shape == (batch, 2), out.shape
    assert jnp.allclose(out, ref, atol=1e-5, rtol=1e-5), (out, ref)

    # Ragged batch (> 1 tile, partial last block) with an explicit small tile.
    batch2 = 50
    x2 = jax.random.normal(kx, (batch2, input_dims), jnp.float32)
    out2 = jax.block_until_ready(dnn_forward(x2, params, tile_batch=16))
    ref2 = dnn_reference(x2, params)
    assert out2.shape == (batch2, 2), out2.shape
    assert jnp.allclose(out2, ref2, atol=1e-5, rtol=1e-5)

    # Batch smaller than the minimum 8-row block (padded block, masked write).
    batch3 = 2
    x3 = jax.random.normal(kx, (batch3, input_dims), jnp.float32)
    out3 = jax.block_until_ready(dnn_forward(x3, params))
    ref3 = dnn_reference(x3, params)
    assert out3.shape == (batch3, 2), out3.shape
    assert jnp.allclose(out3, ref3, atol=1e-5, rtol=1e-5)

    # Native bf16 input path (no wrapper-side cast; half the HBM bytes for x).
    batch4 = 64
    x4 = jax.random.normal(kx, (batch4, input_dims), jnp.float32).astype(jnp.bfloat16)
    out4 = jax.block_until_ready(dnn_forward(x4, params))
    ref4 = dnn_reference(x4, params)
    assert out4.shape == (batch4, 2), out4.shape
    assert jnp.allclose(out4, ref4, atol=1e-3, rtol=1e-3)

    print("KERNEL_OK")
</pallas_src>

<mosaic_0001>
module attributes {stable_mosaic.version = 11 : i64} {
  func.func @dnn_kernel(%arg0: i32, %arg1: memref<8x32xf32, #tpu.memory_space<vmem>>, %arg2: memref<32x4xf32, #tpu.memory_space<vmem>>, %arg3: memref<1x4xf32, #tpu.memory_space<vmem>>, %arg4: memref<4x2xf32, #tpu.memory_space<vmem>>, %arg5: memref<1x2xf32, #tpu.memory_space<vmem>>, %arg6: memref<2x2xf32, #tpu.memory_space<vmem>>, %arg7: memref<1x2xf32, #tpu.memory_space<vmem>>, %arg8: memref<8x2xf32, #tpu.memory_space<vmem>>) attributes {dimension_semantics = [#tpu.dimension_semantics<parallel>], iteration_bounds = array<i64: 1>, scalar_prefetch = 0 : i64, scratch_operands = 0 : i64, tpu.core_type = #tpu.core_type<tc>, window_params = [{transform_indices = @transform_0, window_bounds = array<i64: 8, 32>}, {pipeline_mode = #tpu.pipeline_mode<synchronous>, transform_indices = @transform_1, window_bounds = array<i64: 32, 4>}, {pipeline_mode = #tpu.pipeline_mode<synchronous>, transform_indices = @transform_2, window_bounds = array<i64: 1, 4>}, {pipeline_mode = #tpu.pipeline_mode<synchronous>, transform_indices = @transform_3, window_bounds = array<i64: 4, 2>}, {pipeline_mode = #tpu.pipeline_mode<synchronous>, transform_indices = @transform_4, window_bounds = array<i64: 1, 2>}, {pipeline_mode = #tpu.pipeline_mode<synchronous>, transform_indices = @transform_5, window_bounds = array<i64: 2, 2>}, {pipeline_mode = #tpu.pipeline_mode<synchronous>, transform_indices = @transform_6, window_bounds = array<i64: 1, 2>}, {transform_indices = @transform_7, window_bounds = array<i64: 8, 2>}]} {
    %c0 = arith.constant 0 : index
    %c0_0 = arith.constant 0 : index
    %0 = vector.load %arg1[%c0, %c0_0] : memref<8x32xf32, #tpu.memory_space<vmem>>, vector<8x32xf32>
    %c0_1 = arith.constant 0 : index
    %c0_2 = arith.constant 0 : index
    %1 = vector.load %arg2[%c0_1, %c0_2] : memref<32x4xf32, #tpu.memory_space<vmem>>, vector<32x4xf32>
    %cst = arith.constant dense<0.000000e+00> : vector<8x4xf32>
    %2 = tpu.matmul %0, %1, %cst {dimension_numbers = #tpu.dot_dimension_numbers<[1], [0], [0], [1], [0, 0, 1, 1], [], []>, precision = #tpu.contract_precision<fp32>} : vector<8x32xf32>, vector<32x4xf32>, vector<8x4xf32> -> vector<8x4xf32>
    %c0_3 = arith.constant 0 : index
    %c0_4 = arith.constant 0 : index
    %3 = vector.load %arg3[%c0_3, %c0_4] : memref<1x4xf32, #tpu.memory_space<vmem>>, vector<1x4xf32>
    %4 = vector.broadcast %3 : vector<1x4xf32> to vector<8x4xf32>
    %5 = arith.addf %2, %4 : vector<8x4xf32>
    %cst_5 = arith.constant 0.000000e+00 : f32
    %6 = vector.broadcast %cst_5 : f32 to vector<8x4xf32>
    %7 = arith.maximumf %5, %6 : vector<8x4xf32>
    %c0_6 = arith.constant 0 : index
    %c0_7 = arith.constant 0 : index
    %8 = vector.load %arg4[%c0_6, %c0_7] : memref<4x2xf32, #tpu.memory_space<vmem>>, vector<4x2xf32>
    %cst_8 = arith.constant dense<0.000000e+00> : vector<8x2xf32>
    %9 = tpu.matmul %7, %8, %cst_8 {dimension_numbers = #tpu.dot_dimension_numbers<[1], [0], [0], [1], [0, 0, 1, 1], [], []>, precision = #tpu.contract_precision<fp32>} : vector<8x4xf32>, vector<4x2xf32>, vector<8x2xf32> -> vector<8x2xf32>
    %c0_9 = arith.constant 0 : index
    %c0_10 = arith.constant 0 : index
    %10 = vector.load %arg5[%c0_9, %c0_10] : memref<1x2xf32, #tpu.memory_space<vmem>>, vector<1x2xf32>
    %11 = vector.broadcast %10 : vector<1x2xf32> to vector<8x2xf32>
    %12 = arith.addf %9, %11 : vector<8x2xf32>
    %cst_11 = arith.constant 0.000000e+00 : f32
    %13 = vector.broadcast %cst_11 : f32 to vector<8x2xf32>
    %14 = arith.maximumf %12, %13 : vector<8x2xf32>
    %c0_12 = arith.constant 0 : index
    %c0_13 = arith.constant 0 : index
    %15 = vector.load %arg6[%c0_12, %c0_13] : memref<2x2xf32, #tpu.memory_space<vmem>>, vector<2x2xf32>
    %cst_14 = arith.constant dense<0.000000e+00> : vector<8x2xf32>
    %16 = tpu.matmul %14, %15, %cst_14 {dimension_numbers = #tpu.dot_dimension_numbers<[1], [0], [0], [1], [0, 0, 1, 1], [], []>, precision = #tpu.contract_precision<fp32>} : vector<8x2xf32>, vector<2x2xf32>, vector<8x2xf32> -> vector<8x2xf32>
    %c0_15 = arith.constant 0 : index
    %c0_16 = arith.constant 0 : index
    %17 = vector.load %arg7[%c0_15, %c0_16] : memref<1x2xf32, #tpu.memory_space<vmem>>, vector<1x2xf32>
    %18 = vector.broadcast %17 : vector<1x2xf32> to vector<8x2xf32>
    %19 = arith.addf %16, %18 : vector<8x2xf32>
    %c0_17 = arith.constant 0 : index
    %c0_18 = arith.constant 0 : index
    %20 = vector.load %arg8[%c0_17, %c0_18] : memref<8x2xf32, #tpu.memory_space<vmem>>, vector<8x2xf32>
    tpu.vector_store %arg8[%c0_17, %c0_18], %19 {strides = array<i32>} : memref<8x2xf32, #tpu.memory_space<vmem>>, vector<8x2xf32>,
    return
  }
  func.func @transform_0(%arg0: i32) -> (i32, i32) {
    %c0_i32 = arith.constant 0 : i32
    %c0_i32_0 = arith.constant 0 : i32
    return %arg0, %c0_i32 : i32, i32
  }
  func.func @transform_1(%arg0: i32) -> (i32, i32) {
    %c0_i32 = arith.constant 0 : i32
    %c0_i32_0 = arith.constant 0 : i32
    %c0_i32_1 = arith.constant 0 : i32
    return %c0_i32, %c0_i32_0 : i32, i32
  }
  func.func @transform_2(%arg0: i32) -> (i32, i32) {
    %c0_i32 = arith.constant 0 : i32
    %c0_i32_0 = arith.constant 0 : i32
    %c0_i32_1 = arith.constant 0 : i32
    return %c0_i32, %c0_i32_0 : i32, i32
  }
  func.func @transform_3(%arg0: i32) -> (i32, i32) {
    %c0_i32 = arith.constant 0 : i32
    %c0_i32_0 = arith.constant 0 : i32
    %c0_i32_1 = arith.constant 0 : i32
    return %c0_i32, %c0_i32_0 : i32, i32
  }
  func.func @transform_4(%arg0: i32) -> (i32, i32) {
    %c0_i32 = arith.constant 0 : i32
    %c0_i32_0 = arith.constant 0 : i32
    %c0_i32_1 = arith.constant 0 : i32
    return %c0_i32, %c0_i32_0 : i32, i32
  }
  func.func @transform_5(%arg0: i32) -> (i32, i32) {
    %c0_i32 = arith.constant 0 : i32
    %c0_i32_0 = arith.constant 0 : i32
    %c0_i32_1 = arith.constant 0 : i32
    return %c0_i32, %c0_i32_0 : i32, i32
  }
  func.func @transform_6(%arg0: i32) -> (i32, i32) {
    %c0_i32 = arith.constant 0 : i32
    %c0_i32_0 = arith.constant 0 : i32
    %c0_i32_1 = arith.constant 0 : i32
    return %c0_i32, %c0_i32_0 : i32, i32
  }
  func.func @transform_7(%arg0: i32) -> (i32, i32) {
    %c0_i32 = arith.constant 0 : i32
    %c0_i32_0 = arith.constant 0 : i32
    return %arg0, %c0_i32 : i32, i32
  }
}

</mosaic_0001>

<llo_original>
// kernel: tpu_custom_call.1
$region0: #{tpu_custom_call.1}
  #allocation0 [shape = 'u32[]', space=smem, size = 0x4, offset = 0x4, fixed_abs, tag = 'smem constant byte address 0x4 - core index']
  #allocation1 [shape = 'u32[144,128]{1,0:T(1,128)}', space=vmem, size = 0x12000, scoped, tag = 'internal scratch']
  %s0 = inlined_call_operand.vmem [shape: f32[8,32], index: 0, kind: input, shape index: {}]
  %s1 = inlined_call_operand.vmem [shape: f32[32,4], index: 1, kind: input, shape index: {}]
  %s2 = inlined_call_operand.vmem [shape: f32[1,4], index: 2, kind: input, shape index: {}]
  %s3 = inlined_call_operand.vmem [shape: f32[4,2], index: 3, kind: input, shape index: {}]
  %s4 = inlined_call_operand.vmem [shape: f32[1,2], index: 4, kind: input, shape index: {}]
  %s5 = inlined_call_operand.vmem [shape: f32[2,2], index: 5, kind: input, shape index: {}]
  %s6 = inlined_call_operand.vmem [shape: f32[1,2], index: 6, kind: input, shape index: {}]
  %s7 = inlined_call_operand.vmem [shape: f32[8,2], index: 7, kind: output, shape index: {}]
  %s8 = sld [smem:[#allocation0]]
  $region38: #{tpu_custom_call.1} parent=0
    _
  %s10 = ssub.s32 1, %s8
  %s11 = scalar_select 0, %s10, %s8
  // Predicated region
  $region2: #{tpu_custom_call.1} parent=0 // pred_check
    _
  $region3: #{tpu_custom_call.1} parent=0 // pred_check_branch
    %13 = sbr.rel (0) target = $region5
  $region4: #{tpu_custom_call.1} parent=0 // pred_region
    _
  $region5: #{tpu_custom_call.1} parent=0 // pred_fallthru
    _
  // Predicated region
  $region6: #{tpu_custom_call.1} parent=0 // pred_check
    _
  $region7: #{tpu_custom_call.1} parent=0 // pred_check_branch
    %15 = sbr.rel (0) target = $region9
  $region8: #{tpu_custom_call.1} parent=0 // pred_region
    _
  $region9: #{tpu_custom_call.1} parent=0 // pred_fallthru
    _
  // Predicated region
  $region10: #{tpu_custom_call.1} parent=0 // pred_check
    _
  $region11: #{tpu_custom_call.1} parent=0 // pred_check_branch
    %17 = sbr.rel (0) target = $region13
  $region12: #{tpu_custom_call.1} parent=0 // pred_region
    _
  $region13: #{tpu_custom_call.1} parent=0 // pred_fallthru
    _
  // Predicated region
  $region14: #{tpu_custom_call.1} parent=0 // pred_check
    _
  $region15: #{tpu_custom_call.1} parent=0 // pred_check_branch
    %19 = sbr.rel (0) target = $region17
  $region16: #{tpu_custom_call.1} parent=0 // pred_region
    _
  $region17: #{tpu_custom_call.1} parent=0 // pred_fallthru
    _
  // Predicated region
  $region18: #{tpu_custom_call.1} parent=0 // pred_check
    _
  $region19: #{tpu_custom_call.1} parent=0 // pred_check_branch
    %21 = sbr.rel (0) target = $region21
  $region20: #{tpu_custom_call.1} parent=0 // pred_region
    _
  $region21: #{tpu_custom_call.1} parent=0 // pred_fallthru
    _
  // Predicated region
  $region22: #{tpu_custom_call.1} parent=0 // pred_check
    _
  $region23: #{tpu_custom_call.1} parent=0 // pred_check_branch
    %23 = sbr.rel (0) target = $region25
  $region24: #{tpu_custom_call.1} parent=0 // pred_region
    _
  $region25: #{tpu_custom_call.1} parent=0 // pred_fallthru
    _
  // Predicated region
  $region26: #{tpu_custom_call.1} parent=0 // pred_check
    _
  $region27: #{tpu_custom_call.1} parent=0 // pred_check_branch
    %25 = sbr.rel (0) target = $region29
  $region28: #{tpu_custom_call.1} parent=0 // pred_region
    _
  $region29: #{tpu_custom_call.1} parent=0 // pred_fallthru
    _
  %v26 = vld [vmem:[%s0] sm:$0xff]
  %v27 = vld [vmem:[%s1] sm:$0xff]
  %v28 = vld [vmem:[%s1 + $0x8] sm:$0xff]
  %v29 = vld [vmem:[%s1 + $0x10] sm:$0xff]
  %v30 = vld [vmem:[%s1 + $0x18] sm:$0xff]
  %v31 = vld [vmem:[%s2] sm:$0x1]
  %v33 = vlaneseq
  %v34 = vshrl.u32 %v33, 7
  %v35 = vsub.s32 0, %v34
  %v36 = vrot.slane %v31, %v35
  %vm38 = vcmask 261120
  %v40 = vsel %vm38, %v26, 0
  %42 = vmatprep.subr.mxu0 0.0
  %v43 = vand.u32 %v27, 4294901760
  %44 = vmatpush1.msra.mxu0 %v43
  %45 = vmatprep.subr.mxu0 0.0
  %v46 = vand.u32 %v28, 4294901760
  %47 = vmatpush1.msra.mxu0 %v46
  %48 = vmatprep.subr.mxu0 0.0
  %v49 = vand.u32 %v29, 4294901760
  %50 = vmatpush1.msra.mxu0 %v49
  %51 = vmatprep.subr.mxu0 0.0
  %v52 = vand.u32 %v30, 4294901760
  %53 = vmatpush1.msra.mxu0 %v52
  %54 = vmatprep.subr.mxu0 0.0
  %55 = vmatpush1.msra.mxu0 0.0
  %56 = vmatprep.subr.mxu0 0.0
  %57 = vmatpush1.msra.mxu0 0.0
  %58 = vmatprep.subr.mxu0 0.0
  %59 = vmatpush1.msra.mxu0 0.0
  %60 = vmatprep.subr.mxu0 0.0
  %61 = vmatpush1.msra.mxu0 0.0
  %62 = vmatprep.subr.mxu0 0.0
  %63 = vmatpush1.msra.mxu0 0.0
  %64 = vmatprep.subr.mxu0 0.0
  %65 = vmatpush1.msra.mxu0 0.0
  %66 = vmatprep.subr.mxu0 0.0
  %67 = vmatpush1.msra.mxu0 0.0
  %68 = vmatprep.subr.mxu0 0.0
  %69 = vmatpush1.msra.mxu0 0.0
  %70 = vmatprep.subr.mxu0 0.0
  %71 = vmatpush1.msra.mxu0 0.0
  %72 = vmatprep.subr.mxu0 0.0
  %73 = vmatpush1.msra.mxu0 0.0
  %74 = vmatprep.subr.mxu0 0.0
  %75 = vmatpush1.msra.mxu0 0.0
  %76 = vmatprep.subr.mxu0 0.0
  %77 = vmatpush1.msra.mxu0 0.0
  %78 = vmatprep.subr.mxu0 0.0
  %79 = vmatpush1.msra.mxu0 0.0
  %80 = vmatprep.subr.mxu0 0.0
  %81 = vmatpush1.msra.mxu0 0.0
  %82 = vmatprep.subr.mxu0 0.0
  %83 = vmatpush1.msra.mxu0 0.0
  %84 = vmatprep.subr.mxu0 0.0
  %85 = vmatpush1.msra.mxu0 0.0
  %86 = vmatprep.subr.mxu0 0.0
  %87 = vmatpush1.msra.mxu0 0.0
  %88 = vmatprep.subr.mxu0 0.0
  %89 = vmatpush1.msra.mxu0 0.0
  %90 = vmatprep.subr.mxu0 0.0
  %91 = vmatpush1.msra.mxu0 0.0
  %92 = vmatprep.subr.mxu0 0.0
  %93 = vmatpush1.msra.mxu0 0.0
  %94 = vmatprep.subr.mxu0 0.0
  %95 = vmatpush1.msra.mxu0 0.0
  %96 = vmatprep.subr.mxu0 0.0
  %97 = vmatpush1.msra.mxu0 0.0
  %98 = vmatprep.subr.mxu0 0.0
  %99 = vmatpush1.msra.mxu0 0.0
  %100 = vmatprep.subr.mxu0 0.0
  %101 = vmatpush1.msra.mxu0 0.0
  %102 = vmatprep.subr.mxu0 0.0
  %103 = vmatpush1.msra.mxu0 0.0
  %104 = vmatprep.subr.mxu0 0.0
  %105 = vmatpush1.msra.mxu0 0.0
  %106 = vmatprep.subr.mxu0 0.0
  %107 = vmatpush1.msra.mxu0 0.0
  %108 = vmatprep.subr.mxu0 0.0
  %109 = vmatpush1.msra.mxu0 0.0
  %110 = vmatprep.mubr.f32.mxu0 0.0
  %v111 = vand.u32 %v40, 4294901760
  %v112 = vsub.f32 %v40, %v111
  %v113 = vand.u32 %v112, 4294901760
  %v114 = vsub.f32 %v112, %v113
  %v115 = vand.u32 %v114, 4294901760
  %116 = vmatmul.mubr.f32.gmra.mrb[0].mxu0 %v115
  %v117 = vpop.f32.mrb[0].mxu0
  %v118 = vadd.f32 %v36, %v117
  %v119 = vpop.f32.mrb[0].mxu0
  %120 = vdwg.mxu0
  %121 = vmatprep.subr.mxu0 0.0
  %v122 = vand.u32 %v27, 4294901760
  %v123 = vsub.f32 %v27, %v122
  %v124 = vand.u32 %v123, 4294901760
  %v125 = vsub.f32 %v123, %v124
  %v126 = vand.u32 %v125, 4294901760
  %127 = vmatpush1.msra.mxu0 %v126
  %128 = vmatprep.subr.mxu0 0.0
  %v129 = vand.u32 %v28, 4294901760
  %v130 = vsub.f32 %v28, %v129
  %v131 = vand.u32 %v130, 4294901760
  %v132 = vsub.f32 %v130, %v131
  %v133 = vand.u32 %v132, 4294901760
  %134 = vmatpush1.msra.mxu0 %v133
  %135 = vmatprep.subr.mxu0 0.0
  %v136 = vand.u32 %v29, 4294901760
  %v137 = vsub.f32 %v29, %v136
  %v138 = vand.u32 %v137, 4294901760
  %v139 = vsub.f32 %v137, %v138
  %v140 = vand.u32 %v139, 4294901760
  %141 = vmatpush1.msra.mxu0 %v140
  %142 = vmatprep.subr.mxu0 0.0
  %v143 = vand.u32 %v30, 4294901760
  %v144 = vsub.f32 %v30, %v143
  %v145 = vand.u32 %v144, 4294901760
  %v146 = vsub.f32 %v144, %v145
  %v147 = vand.u32 %v146, 4294901760
  %148 = vmatpush1.msra.mxu0 %v147
  %149 = vmatprep.subr.mxu0 0.0
  %150 = vmatpush1.msra.mxu0 0.0
  %151 = vmatprep.subr.mxu0 0.0
  %152 = vmatpush1.msra.mxu0 0.0
  %153 = vmatprep.subr.mxu0 0.0
  %154 = vmatpush1.msra.mxu0 0.0
  %155 = vmatprep.subr.mxu0 0.0
  %156 = vmatpush1.msra.mxu0 0.0
  %157 = vmatprep.subr.mxu0 0.0
  %158 = vmatpush1.msra.mxu0 0.0
  %159 = vmatprep.subr.mxu0 0.0
  %160 = vmatpush1.msra.mxu0 0.0
  %161 = vmatprep.subr.mxu0 0.0
  %162 = vmatpush1.msra.mxu0 0.0
  %163 = vmatprep.subr.mxu0 0.0
  %164 = vmatpush1.msra.mxu0 0.0
  %165 = vmatprep.subr.mxu0 0.0
  %166 = vmatpush1.msra.mxu0 0.0
  %167 = vmatprep.subr.mxu0 0.0
  %168 = vmatpush1.msra.mxu0 0.0
  %169 = vmatprep.subr.mxu0 0.0
  %170 = vmatpush1.msra.mxu0 0.0
  %171 = vmatprep.subr.mxu0 0.0
  %172 = vmatpush1.msra.mxu0 0.0
  %173 = vmatprep.subr.mxu0 0.0
  %174 = vmatpush1.msra.mxu0 0.0
  %175 = vmatprep.subr.mxu0 0.0
  %176 = vmatpush1.msra.mxu0 0.0
  %177 = vmatprep.subr.mxu0 0.0
  %178 = vmatpush1.msra.mxu0 0.0
  %179 = vmatprep.subr.mxu0 0.0
  %180 = vmatpush1.msra.mxu0 0.0
  %181 = vmatprep.subr.mxu0 0.0
  %182 = vmatpush1.msra.mxu0 0.0
  %183 = vmatprep.subr.mxu0 0.0
  %184 = vmatpush1.msra.mxu0 0.0
  %185 = vmatprep.subr.mxu0 0.0
  %186 = vmatpush1.msra.mxu0 0.0
  %187 = vmatprep.subr.mxu0 0.0
  %188 = vmatpush1.msra.mxu0 0.0
  %189 = vmatprep.subr.mxu0 0.0
  %190 = vmatpush1.msra.mxu0 0.0
  %191 = vmatprep.subr.mxu0 0.0
  %192 = vmatpush1.msra.mxu0 0.0
  %193 = vmatprep.subr.mxu0 0.0
  %194 = vmatpush1.msra.mxu0 0.0
  %195 = vmatprep.subr.mxu0 0.0
  %196 = vmatpush1.msra.mxu0 0.0
  %197 = vmatprep.subr.mxu0 0.0
  %198 = vmatpush1.msra.mxu0 0.0
  %199 = vmatprep.subr.mxu0 0.0
  %200 = vmatpush1.msra.mxu0 0.0
  %201 = vmatprep.subr.mxu0 0.0
  %202 = vmatpush1.msra.mxu0 0.0
  %203 = vmatprep.subr.mxu0 0.0
  %204 = vmatpush1.msra.mxu0 0.0
  %205 = vmatprep.mubr.f32.mxu0 0.0
  %v206 = vand.u32 %v40, 4294901760
  %207 = vmatmul.mubr.f32.gmra.mrb[0].mxu0 %v206
  %v208 = vpop.f32.mrb[0].mxu0
  %v209 = vadd.f32 %v118, %v208
  %v210 = vpop.f32.mrb[0].mxu0
  %211 = vdwg.mxu0
  %212 = vmatprep.subr.mxu0 0.0
  %v213 = vand.u32 %v27, 4294901760
  %v214 = vsub.f32 %v27, %v213
  %215 = vmatpush1.msra.mxu0 %v214
  %216 = vmatprep.subr.mxu0 0.0
  %v217 = vand.u32 %v28, 4294901760
  %v218 = vsub.f32 %v28, %v217
  %219 = vmatpush1.msra.mxu0 %v218
  %220 = vmatprep.subr.mxu0 0.0
  %v221 = vand.u32 %v29, 4294901760
  %v222 = vsub.f32 %v29, %v221
  %223 = vmatpush1.msra.mxu0 %v222
  %224 = vmatprep.subr.mxu0 0.0
  %v225 = vand.u32 %v30, 4294901760
  %v226 = vsub.f32 %v30, %v225
  %227 = vmatpush1.msra.mxu0 %v226
  %228 = vmatprep.subr.mxu0 0.0
  %229 = vmatpush1.msra.mxu0 0.0
  %230 = vmatprep.subr.mxu0 0.0
  %231 = vmatpush1.msra.mxu0 0.0
  %232 = vmatprep.subr.mxu0 0.0
  %233 = vmatpush1.msra.mxu0 0.0
  %234 = vmatprep.subr.mxu0 0.0
  %235 = vmatpush1.msra.mxu0 0.0
  %236 = vmatprep.subr.mxu0 0.0
  %237 = vmatpush1.msra.mxu0 0.0
  %238 = vmatprep.subr.mxu0 0.0
  %239 = vmatpush1.msra.mxu0 0.0
  %240 = vmatprep.subr.mxu0 0.0
  %241 = vmatpush1.msra.mxu0 0.0
  %242 = vmatprep.subr.mxu0 0.0
  %243 = vmatpush1.msra.mxu0 0.0
  %244 = vmatprep.subr.mxu0 0.0
  %245 = vmatpush1.msra.mxu0 0.0
  %246 = vmatprep.subr.mxu0 0.0
  %247 = vmatpush1.msra.mxu0 0.0
  %248 = vmatprep.subr.mxu0 0.0
  %249 = vmatpush1.msra.mxu0 0.0
  %250 = vmatprep.subr.mxu0 0.0
  %251 = vmatpush1.msra.mxu0 0.0
  %252 = vmatprep.subr.mxu0 0.0
  %253 = vmatpush1.msra.mxu0 0.0
  %254 = vmatprep.subr.mxu0 0.0
  %255 = vmatpush1.msra.mxu0 0.0
  %256 = vmatprep.subr.mxu0 0.0
  %257 = vmatpush1.msra.mxu0 0.0
  %258 = vmatprep.subr.mxu0 0.0
  %259 = vmatpush1.msra.mxu0 0.0
  %260 = vmatprep.subr.mxu0 0.0
  %261 = vmatpush1.msra.mxu0 0.0
  %262 = vmatprep.subr.mxu0 0.0
  %263 = vmatpush1.msra.mxu0 0.0
  %264 = vmatprep.subr.mxu0 0.0
  %265 = vmatpush1.msra.mxu0 0.0
  %266 = vmatprep.subr.mxu0 0.0
  %267 = vmatpush1.msra.mxu0 0.0
  %268 = vmatprep.subr.mxu0 0.0
  %269 = vmatpush1.msra.mxu0 0.0
  %270 = vmatprep.subr.mxu0 0.0
  %271 = vmatpush1.msra.mxu0 0.0
  %272 = vmatprep.subr.mxu0 0.0
  %273 = vmatpush1.msra.mxu0 0.0
  %274 = vmatprep.subr.mxu0 0.0
  %275 = vmatpush1.msra.mxu0 0.0
  %276 = vmatprep.subr.mxu0 0.0
  %277 = vmatpush1.msra.mxu0 0.0
  %278 = vmatprep.subr.mxu0 0.0
  %279 = vmatpush1.msra.mxu0 0.0
  %280 = vmatprep.subr.mxu0 0.0
  %281 = vmatpush1.msra.mxu0 0.0
  %282 = vmatprep.subr.mxu0 0.0
  %283 = vmatpush1.msra.mxu0 0.0
  %284 = vmatprep.mubr.f32.mxu0 0.0
  %v285 = vand.u32 %v40, 4294901760
  %v286 = vsub.f32 %v40, %v285
  %287 = vmatmul.mubr.f32.gmra.mrb[0].mxu0 %v286
  %v288 = vpop.f32.mrb[0].mxu0
  %v289 = vadd.f32 %v209, %v288
  %v290 = vpop.f32.mrb[0].mxu0
  %291 = vdwg.mxu0
  %292 = vmatprep.subr.mxu0 0.0
  %v293 = vand.u32 %v27, 4294901760
  %294 = vmatpush1.msra.mxu0 %v293
  %295 = vmatprep.subr.mxu0 0.0
  %v296 = vand.u32 %v28, 4294901760
  %297 = vmatpush1.msra.mxu0 %v296
  %298 = vmatprep.subr.mxu0 0.0
  %v299 = vand.u32 %v29, 4294901760
  %300 = vmatpush1.msra.mxu0 %v299
  %301 = vmatprep.subr.mxu0 0.0
  %v302 = vand.u32 %v30, 4294901760
  %303 = vmatpush1.msra.mxu0 %v302
  %304 = vmatprep.subr.mxu0 0.0
  %305 = vmatpush1.msra.mxu0 0.0
  %306 = vmatprep.subr.mxu0 0.0
  %307 = vmatpush1.msra.mxu0 0.0
  %308 = vmatprep.subr.mxu0 0.0
  %309 = vmatpush1.msra.mxu0 0.0
  %310 = vmatprep.subr.mxu0 0.0
  %311 = vmatpush1.msra.mxu0 0.0
  %312 = vmatprep.subr.mxu0 0.0
  %313 = vmatpush1.msra.mxu0 0.0
  %314 = vmatprep.subr.mxu0 0.0
  %315 = vmatpush1.msra.mxu0 0.0
  %316 = vmatprep.subr.mxu0 0.0
  %317 = vmatpush1.msra.mxu0 0.0
  %318 = vmatprep.subr.mxu0 0.0
  %319 = vmatpush1.msra.mxu0 0.0
  %320 = vmatprep.subr.mxu0 0.0
  %321 = vmatpush1.msra.mxu0 0.0
  %322 = vmatprep.subr.mxu0 0.0
  %323 = vmatpush1.msra.mxu0 0.0
  %324 = vmatprep.subr.mxu0 0.0
  %325 = vmatpush1.msra.mxu0 0.0
  %326 = vmatprep.subr.mxu0 0.0
  %327 = vmatpush1.msra.mxu0 0.0
  %328 = vmatprep.subr.mxu0 0.0
  %329 = vmatpush1.msra.mxu0 0.0
  %330 = vmatprep.subr.mxu0 0.0
  %331 = vmatpush1.msra.mxu0 0.0
  %332 = vmatprep.subr.mxu0 0.0
  %333 = vmatpush1.msra.mxu0 0.0
  %334 = vmatprep.subr.mxu0 0.0
  %335 = vmatpush1.msra.mxu0 0.0
  %336 = vmatprep.subr.mxu0 0.0
  %337 = vmatpush1.msra.mxu0 0.0
  %338 = vmatprep.subr.mxu0 0.0
  %339 = vmatpush1.msra.mxu0 0.0
  %340 = vmatprep.subr.mxu0 0.0
  %341 = vmatpush1.msra.mxu0 0.0
  %342 = vmatprep.subr.mxu0 0.0
  %343 = vmatpush1.msra.mxu0 0.0
  %344 = vmatprep.subr.mxu0 0.0
  %345 = vmatpush1.msra.mxu0 0.0
  %346 = vmatprep.subr.mxu0 0.0
  %347 = vmatpush1.msra.mxu0 0.0
  %348 = vmatprep.subr.mxu0 0.0
  %349 = vmatpush1.msra.mxu0 0.0
  %350 = vmatprep.subr.mxu0 0.0
  %351 = vmatpush1.msra.mxu0 0.0
  %352 = vmatprep.subr.mxu0 0.0
  %353 = vmatpush1.msra.mxu0 0.0
  %354 = vmatprep.subr.mxu0 0.0
  %355 = vmatpush1.msra.mxu0 0.0
  %356 = vmatprep.subr.mxu0 0.0
  %357 = vmatpush1.msra.mxu0 0.0
  %358 = vmatprep.subr.mxu0 0.0
  %359 = vmatpush1.msra.mxu0 0.0
  %360 = vmatprep.mubr.f32.mxu0 0.0
  %v361 = vand.u32 %v40, 4294901760
  %v362 = vsub.f32 %v40, %v361
  %v363 = vand.u32 %v362, 4294901760
  %364 = vmatmul.mubr.f32.gmra.mrb[0].mxu0 %v363
  %v365 = vpop.f32.mrb[0].mxu0
  %v366 = vadd.f32 %v289, %v365
  %v367 = vpop.f32.mrb[0].mxu0
  %368 = vdwg.mxu0
  %369 = vmatprep.subr.mxu0 0.0
  %v370 = vand.u32 %v27, 4294901760
  %v371 = vsub.f32 %v27, %v370
  %v372 = vand.u32 %v371, 4294901760
  %373 = vmatpush1.msra.mxu0 %v372
  %374 = vmatprep.subr.mxu0 0.0
  %v375 = vand.u32 %v28, 4294901760
  %v376 = vsub.f32 %v28, %v375
  %v377 = vand.u32 %v376, 4294901760
  %378 = vmatpush1.msra.mxu0 %v377
  %379 = vmatprep.subr.mxu0 0.0
  %v380 = vand.u32 %v29, 4294901760
  %v381 = vsub.f32 %v29, %v380
  %v382 = vand.u32 %v381, 4294901760
  %383 = vmatpush1.msra.mxu0 %v382
  %384 = vmatprep.subr.mxu0 0.0
  %v385 = vand.u32 %v30, 4294901760
  %v386 = vsub.f32 %v30, %v385
  %v387 = vand.u32 %v386, 4294901760
  %388 = vmatpush1.msra.mxu0 %v387
  %389 = vmatprep.subr.mxu0 0.0
  %390 = vmatpush1.msra.mxu0 0.0
  %391 = vmatprep.subr.mxu0 0.0
  %392 = vmatpush1.msra.mxu0 0.0
  %393 = vmatprep.subr.mxu0 0.0
  %394 = vmatpush1.msra.mxu0 0.0
  %395 = vmatprep.subr.mxu0 0.0
  %396 = vmatpush1.msra.mxu0 0.0
  %397 = vmatprep.subr.mxu0 0.0
  %398 = vmatpush1.msra.mxu0 0.0
  %399 = vmatprep.subr.mxu0 0.0
  %400 = vmatpush1.msra.mxu0 0.0
  %401 = vmatprep.subr.mxu0 0.0
  %402 = vmatpush1.msra.mxu0 0.0
  %403 = vmatprep.subr.mxu0 0.0
  %404 = vmatpush1.msra.mxu0 0.0
  %405 = vmatprep.subr.mxu0 0.0
  %406 = vmatpush1.msra.mxu0 0.0
  %407 = vmatprep.subr.mxu0 0.0
  %408 = vmatpush1.msra.mxu0 0.0
  %409 = vmatprep.subr.mxu0 0.0
  %410 = vmatpush1.msra.mxu0 0.0
  %411 = vmatprep.subr.mxu0 0.0
  %412 = vmatpush1.msra.mxu0 0.0
  %413 = vmatprep.subr.mxu0 0.0
  %414 = vmatpush1.msra.mxu0 0.0
  %415 = vmatprep.subr.mxu0 0.0
  %416 = vmatpush1.msra.mxu0 0.0
  %417 = vmatprep.subr.mxu0 0.0
  %418 = vmatpush1.msra.mxu0 0.0
  %419 = vmatprep.subr.mxu0 0.0
  %420 = vmatpush1.msra.mxu0 0.0
  %421 = vmatprep.subr.mxu0 0.0
  %422 = vmatpush1.msra.mxu0 0.0
  %423 = vmatprep.subr.mxu0 0.0
  %424 = vmatpush1.msra.mxu0 0.0
  %425 = vmatprep.subr.mxu0 0.0
  %426 = vmatpush1.msra.mxu0 0.0
  %427 = vmatprep.subr.mxu0 0.0
  %428 = vmatpush1.msra.mxu0 0.0
  %429 = vmatprep.subr.mxu0 0.0
  %430 = vmatpush1.msra.mxu0 0.0
  %431 = vmatprep.subr.mxu0 0.0
  %432 = vmatpush1.msra.mxu0 0.0
  %433 = vmatprep.subr.mxu0 0.0
  %434 = vmatpush1.msra.mxu0 0.0
  %435 = vmatprep.subr.mxu0 0.0
  %436 = vmatpush1.msra.mxu0 0.0
  %437 = vmatprep.subr.mxu0 0.0
  %438 = vmatpush1.msra.mxu0 0.0
  %439 = vmatprep.subr.mxu0 0.0
  %440 = vmatpush1.msra.mxu0 0.0
  %441 = vmatprep.subr.mxu0 0.0
  %442 = vmatpush1.msra.mxu0 0.0
  %443 = vmatprep.subr.mxu0 0.0
  %444 = vmatpush1.msra.mxu0 0.0
  %445 = vmatprep.mubr.f32.mxu0 0.0
  %v446 = vand.u32 %v40, 4294901760
  %447 = vmatmul.mubr.f32.gmra.mrb[0].mxu0 %v446
  %v448 = vpop.f32.mrb[0].mxu0
  %v449 = vadd.f32 %v366, %v448
  %v450 = vpop.f32.mrb[0].mxu0
  %451 = vdwg.mxu0
  %452 = vmatprep.subr.mxu0 0.0
  %v453 = vand.u32 %v27, 4294901760
  %454 = vmatpush1.msra.mxu0 %v453
  %455 = vmatprep.subr.mxu0 0.0
  %v456 = vand.u32 %v28, 4294901760
  %457 = vmatpush1.msra.mxu0 %v456
  %458 = vmatprep.subr.mxu0 0.0
  %v459 = vand.u32 %v29, 4294901760
  %460 = vmatpush1.msra.mxu0 %v459
  %461 = vmatprep.subr.mxu0 0.0
  %v462 = vand.u32 %v30, 4294901760
  %463 = vmatpush1.msra.mxu0 %v462
  %464 = vmatprep.subr.mxu0 0.0
  %465 = vmatpush1.msra.mxu0 0.0
  %466 = vmatprep.subr.mxu0 0.0
  %467 = vmatpush1.msra.mxu0 0.0
  %468 = vmatprep.subr.mxu0 0.0
  %469 = vmatpush1.msra.mxu0 0.0
  %470 = vmatprep.subr.mxu0 0.0
  %471 = vmatpush1.msra.mxu0 0.0
  %472 = vmatprep.subr.mxu0 0.0
  %473 = vmatpush1.msra.mxu0 0.0
  %474 = vmatprep.subr.mxu0 0.0
  %475 = vmatpush1.msra.mxu0 0.0
  %476 = vmatprep.subr.mxu0 0.0
  %477 = vmatpush1.msra.mxu0 0.0
  %478 = vmatprep.subr.mxu0 0.0
  %479 = vmatpush1.msra.mxu0 0.0
  %480 = vmatprep.subr.mxu0 0.0
  %481 = vmatpush1.msra.mxu0 0.0
  %482 = vmatprep.subr.mxu0 0.0
  %483 = vmatpush1.msra.mxu0 0.0
  %484 = vmatprep.subr.mxu0 0.0
  %485 = vmatpush1.msra.mxu0 0.0
  %486 = vmatprep.subr.mxu0 0.0
  %487 = vmatpush1.msra.mxu0 0.0
  %488 = vmatprep.subr.mxu0 0.0
  %489 = vmatpush1.msra.mxu0 0.0
  %490 = vmatprep.subr.mxu0 0.0
  %491 = vmatpush1.msra.mxu0 0.0
  %492 = vmatprep.subr.mxu0 0.0
  %493 = vmatpush1.msra.mxu0 0.0
  %494 = vmatprep.subr.mxu0 0.0
  %495 = vmatpush1.msra.mxu0 0.0
  %496 = vmatprep.subr.mxu0 0.0
  %497 = vmatpush1.msra.mxu0 0.0
  %498 = vmatprep.subr.mxu0 0.0
  %499 = vmatpush1.msra.mxu0 0.0
  %500 = vmatprep.subr.mxu0 0.0
  %501 = vmatpush1.msra.mxu0 0.0
  %502 = vmatprep.subr.mxu0 0.0
  %503 = vmatpush1.msra.mxu0 0.0
  %504 = vmatprep.subr.mxu0 0.0
  %505 = vmatpush1.msra.mxu0 0.0
  %506 = vmatprep.subr.mxu0 0.0
  %507 = vmatpush1.msra.mxu0 0.0
  %508 = vmatprep.subr.mxu0 0.0
  %509 = vmatpush1.msra.mxu0 0.0
  %510 = vmatprep.subr.mxu0 0.0
  %511 = vmatpush1.msra.mxu0 0.0
  %512 = vmatprep.subr.mxu0 0.0
  %513 = vmatpush1.msra.mxu0 0.0
  %514 = vmatprep.subr.mxu0 0.0
  %515 = vmatpush1.msra.mxu0 0.0
  %516 = vmatprep.subr.mxu0 0.0
  %517 = vmatpush1.msra.mxu0 0.0
  %518 = vmatprep.subr.mxu0 0.0
  %519 = vmatpush1.msra.mxu0 0.0
  %520 = vmatprep.mubr.f32.mxu0 0.0
  %v521 = vand.u32 %v40, 4294901760
  %522 = vmatmul.mubr.f32.gmra.mrb[0].mxu0 %v521
  %v523 = vpop.f32.mrb[0].mxu0
  %v524 = vadd.f32 %v449, %v523
  %v525 = vpop.f32.mrb[0].mxu0
  %526 = vdwg.mxu0
  %v527 = vmax.f32 %v524, 0.0
  %v528 = vld [vmem:[%s3] sm:$0xf]
  %v529 = vld [vmem:[%s4] sm:$0x1]
  %v531 = vlaneseq
  %v532 = vshrl.u32 %v531, 7
  %v533 = vsub.s32 0, %v532
  %v534 = vrot.slane %v529, %v533
  %vm536 = vcmask 31744
  %v538 = vsel %vm536, %v527, 0
  %vm540 = vcmask 1043456
  %v542 = vsel %vm540, %v528, 0
  %544 = vmatprep.subr.mxu0 0.0
  %v545 = vand.u32 %v542, 4294901760
  %546 = vmatpush1.msra.mxu0 %v545
  %547 = vmatprep.subr.mxu0 0.0
  %548 = vmatpush1.msra.mxu0 0.0
  %549 = vmatprep.subr.mxu0 0.0
  %550 = vmatpush1.msra.mxu0 0.0
  %551 = vmatprep.subr.mxu0 0.0
  %552 = vmatpush1.msra.mxu0 0.0
  %553 = vmatprep.subr.mxu0 0.0
  %554 = vmatpush1.msra.mxu0 0.0
  %555 = vmatprep.subr.mxu0 0.0
  %556 = vmatpush1.msra.mxu0 0.0
  %557 = vmatprep.subr.mxu0 0.0
  %558 = vmatpush1.msra.mxu0 0.0
  %559 = vmatprep.subr.mxu0 0.0
  %560 = vmatpush1.msra.mxu0 0.0
  %561 = vmatprep.subr.mxu0 0.0
  %562 = vmatpush1.msra.mxu0 0.0
  %563 = vmatprep.subr.mxu0 0.0
  %564 = vmatpush1.msra.mxu0 0.0
  %565 = vmatprep.subr.mxu0 0.0
  %566 = vmatpush1.msra.mxu0 0.0
  %567 = vmatprep.subr.mxu0 0.0
  %568 = vmatpush1.msra.mxu0 0.0
  %569 = vmatprep.subr.mxu0 0.0
  %570 = vmatpush1.msra.mxu0 0.0
  %571 = vmatprep.subr.mxu0 0.0
  %572 = vmatpush1.msra.mxu0 0.0
  %573 = vmatprep.subr.mxu0 0.0
  %574 = vmatpush1.msra.mxu0 0.0
  %575 = vmatprep.subr.mxu0 0.0
  %576 = vmatpush1.msra.mxu0 0.0
  %577 = vmatprep.subr.mxu0 0.0
  %578 = vmatpush1.msra.mxu0 0.0
  %579 = vmatprep.subr.mxu0 0.0
  %580 = vmatpush1.msra.mxu0 0.0
  %581 = vmatprep.subr.mxu0 0.0
  %582 = vmatpush1.msra.mxu0 0.0
  %583 = vmatprep.subr.mxu0 0.0
  %584 = vmatpush1.msra.mxu0 0.0
  %585 = vmatprep.subr.mxu0 0.0
  %586 = vmatpush1.msra.mxu0 0.0
  %587 = vmatprep.subr.mxu0 0.0
  %588 = vmatpush1.msra.mxu0 0.0
  %589 = vmatprep.subr.mxu0 0.0
  %590 = vmatpush1.msra.mxu0 0.0
  %591 = vmatprep.subr.mxu0 0.0
  %592 = vmatpush1.msra.mxu0 0.0
  %593 = vmatprep.subr.mxu0 0.0
  %594 = vmatpush1.msra.mxu0 0.0
  %595 = vmatprep.subr.mxu0 0.0
  %596 = vmatpush1.msra.mxu0 0.0
  %597 = vmatprep.subr.mxu0 0.0
  %598 = vmatpush1.msra.mxu0 0.0
  %599 = vmatprep.subr.mxu0 0.0
  %600 = vmatpush1.msra.mxu0 0.0
  %601 = vmatprep.subr.mxu0 0.0
  %602 = vmatpush1.msra.mxu0 0.0
  %603 = vmatprep.subr.mxu0 0.0
  %604 = vmatpush1.msra.mxu0 0.0
  %605 = vmatprep.subr.mxu0 0.0
  %606 = vmatpush1.msra.mxu0 0.0
  %607 = vmatprep.subr.mxu0 0.0
  %608 = vmatpush1.msra.mxu0 0.0
  %609 = vmatprep.mubr.f32.mxu0 0.0
  %v610 = vand.u32 %v538, 4294901760
  %v611 = vsub.f32 %v538, %v610
  %v612 = vand.u32 %v611, 4294901760
  %v613 = vsub.f32 %v611, %v612
  %v614 = vand.u32 %v613, 4294901760
  %615 = vmatmul.mubr.f32.gmra.mrb[0].mxu0 %v614
  %v616 = vpop.f32.mrb[0].mxu0
  %v617 = vadd.f32 %v534, %v616
  %v618 = vpop.f32.mrb[0].mxu0
  %619 = vdwg.mxu0
  %620 = vmatprep.subr.mxu0 0.0
  %v621 = vand.u32 %v542, 4294901760
  %v622 = vsub.f32 %v542, %v621
  %v623 = vand.u32 %v622, 4294901760
  %v624 = vsub.f32 %v622, %v623
  %v625 = vand.u32 %v624, 4294901760
  %626 = vmatpush1.msra.mxu0 %v625
  %627 = vmatprep.subr.mxu0 0.0
  %628 = vmatpush1.msra.mxu0 0.0
  %629 = vmatprep.subr.mxu0 0.0
  %630 = vmatpush1.msra.mxu0 0.0
  %631 = vmatprep.subr.mxu0 0.0
  %632 = vmatpush1.msra.mxu0 0.0
  %633 = vmatprep.subr.mxu0 0.0
  %634 = vmatpush1.msra.mxu0 0.0
  %635 = vmatprep.subr.mxu0 0.0
  %636 = vmatpush1.msra.mxu0 0.0
  %637 = vmatprep.subr.mxu0 0.0
  %638 = vmatpush1.msra.mxu0 0.0
  %639 = vmatprep.subr.mxu0 0.0
  %640 = vmatpush1.msra.mxu0 0.0
  %641 = vmatprep.subr.mxu0 0.0
  %642 = vmatpush1.msra.mxu0 0.0
  %643 = vmatprep.subr.mxu0 0.0
  %644 = vmatpush1.msra.mxu0 0.0
  %645 = vmatprep.subr.mxu0 0.0
  %646 = vmatpush1.msra.mxu0 0.0
  %647 = vmatprep.subr.mxu0 0.0
  %648 = vmatpush1.msra.mxu0 0.0
  %649 = vmatprep.subr.mxu0 0.0
  %650 = vmatpush1.msra.mxu0 0.0
  %651 = vmatprep.subr.mxu0 0.0
  %652 = vmatpush1.msra.mxu0 0.0
  %653 = vmatprep.subr.mxu0 0.0
  %654 = vmatpush1.msra.mxu0 0.0
  %655 = vmatprep.subr.mxu0 0.0
  %656 = vmatpush1.msra.mxu0 0.0
  %657 = vmatprep.subr.mxu0 0.0
  %658 = vmatpush1.msra.mxu0 0.0
  %659 = vmatprep.subr.mxu0 0.0
  %660 = vmatpush1.msra.mxu0 0.0
  %661 = vmatprep.subr.mxu0 0.0
  %662 = vmatpush1.msra.mxu0 0.0
  %663 = vmatprep.subr.mxu0 0.0
  %664 = vmatpush1.msra.mxu0 0.0
  %665 = vmatprep.subr.mxu0 0.0
  %666 = vmatpush1.msra.mxu0 0.0
  %667 = vmatprep.subr.mxu0 0.0
  %668 = vmatpush1.msra.mxu0 0.0
  %669 = vmatprep.subr.mxu0 0.0
  %670 = vmatpush1.msra.mxu0 0.0
  %671 = vmatprep.subr.mxu0 0.0
  %672 = vmatpush1.msra.mxu0 0.0
  %673 = vmatprep.subr.mxu0 0.0
  %674 = vmatpush1.msra.mxu0 0.0
  %675 = vmatprep.subr.mxu0 0.0
  %676 = vmatpush1.msra.mxu0 0.0
  %677 = vmatprep.subr.mxu0 0.0
  %678 = vmatpush1.msra.mxu0 0.0
  %679 = vmatprep.subr.mxu0 0.0
  %680 = vmatpush1.msra.mxu0 0.0
  %681 = vmatprep.subr.mxu0 0.0
  %682 = vmatpush1.msra.mxu0 0.0
  %683 = vmatprep.subr.mxu0 0.0
  %684 = vmatpush1.msra.mxu0 0.0
  %685 = vmatprep.subr.mxu0 0.0
  %686 = vmatpush1.msra.mxu0 0.0
  %687 = vmatprep.subr.mxu0 0.0
  %688 = vmatpush1.msra.mxu0 0.0
  %689 = vmatprep.mubr.f32.mxu0 0.0
  %v690 = vand.u32 %v538, 4294901760
  %691 = vmatmul.mubr.f32.gmra.mrb[0].mxu0 %v690
  %v692 = vpop.f32.mrb[0].mxu0
  %v693 = vadd.f32 %v617, %v692
  %v694 = vpop.f32.mrb[0].mxu0
  %695 = vdwg.mxu0
  %696 = vmatprep.subr.mxu0 0.0
  %v697 = vand.u32 %v542, 4294901760
  %v698 = vsub.f32 %v542, %v697
  %699 = vmatpush1.msra.mxu0 %v698
  %700 = vmatprep.subr.mxu0 0.0
  %701 = vmatpush1.msra.mxu0 0.0
  %702 = vmatprep.subr.mxu0 0.0
  %703 = vmatpush1.msra.mxu0 0.0
  %704 = vmatprep.subr.mxu0 0.0
  %705 = vmatpush1.msra.mxu0 0.0
  %706 = vmatprep.subr.mxu0 0.0
  %707 = vmatpush1.msra.mxu0 0.0
  %708 = vmatprep.subr.mxu0 0.0
  %709 = vmatpush1.msra.mxu0 0.0
  %710 = vmatprep.subr.mxu0 0.0
  %711 = vmatpush1.msra.mxu0 0.0
  %712 = vmatprep.subr.mxu0 0.0
  %713 = vmatpush1.msra.mxu0 0.0
  %714 = vmatprep.subr.mxu0 0.0
  %715 = vmatpush1.msra.mxu0 0.0
  %716 = vmatprep.subr.mxu0 0.0
  %717 = vmatpush1.msra.mxu0 0.0
  %718 = vmatprep.subr.mxu0 0.0
  %719 = vmatpush1.msra.mxu0 0.0
  %720 = vmatprep.subr.mxu0 0.0
  %721 = vmatpush1.msra.mxu0 0.0
  %722 = vmatprep.subr.mxu0 0.0
  %723 = vmatpush1.msra.mxu0 0.0
  %724 = vmatprep.subr.mxu0 0.0
  %725 = vmatpush1.msra.mxu0 0.0
  %726 = vmatprep.subr.mxu0 0.0
  %727 = vmatpush1.msra.mxu0 0.0
  %728 = vmatprep.subr.mxu0 0.0
  %729 = vmatpush1.msra.mxu0 0.0
  %730 = vmatprep.subr.mxu0 0.0
  %731 = vmatpush1.msra.mxu0 0.0
  %732 = vmatprep.subr.mxu0 0.0
  %733 = vmatpush1.msra.mxu0 0.0
  %734 = vmatprep.subr.mxu0 0.0
  %735 = vmatpush1.msra.mxu0 0.0
  %736 = vmatprep.subr.mxu0 0.0
  %737 = vmatpush1.msra.mxu0 0.0
  %738 = vmatprep.subr.mxu0 0.0
  %739 = vmatpush1.msra.mxu0 0.0
  %740 = vmatprep.subr.mxu0 0.0
  %741 = vmatpush1.msra.mxu0 0.0
  %742 = vmatprep.subr.mxu0 0.0
  %743 = vmatpush1.msra.mxu0 0.0
  %744 = vmatprep.subr.mxu0 0.0
  %745 = vmatpush1.msra.mxu0 0.0
  %746 = vmatprep.subr.mxu0 0.0
  %747 = vmatpush1.msra.mxu0 0.0
  %748 = vmatprep.subr.mxu0 0.0
  %749 = vmatpush1.msra.mxu0 0.0
  %750 = vmatprep.subr.mxu0 0.0
  %751 = vmatpush1.msra.mxu0 0.0
  %752 = vmatprep.subr.mxu0 0.0
  %753 = vmatpush1.msra.mxu0 0.0
  %754 = vmatprep.subr.mxu0 0.0
  %755 = vmatpush1.msra.mxu0 0.0
  %756 = vmatprep.subr.mxu0 0.0
  %757 = vmatpush1.msra.mxu0 0.0
  %758 = vmatprep.subr.mxu0 0.0
  %759 = vmatpush1.msra.mxu0 0.0
  %760 = vmatprep.subr.mxu0 0.0
  %761 = vmatpush1.msra.mxu0 0.0
  %762 = vmatprep.mubr.f32.mxu0 0.0
  %v763 = vand.u32 %v538, 4294901760
  %v764 = vsub.f32 %v538, %v763
  %765 = vmatmul.mubr.f32.gmra.mrb[0].mxu0 %v764
  %v766 = vpop.f32.mrb[0].mxu0
  %v767 = vadd.f32 %v693, %v766
  %v768 = vpop.f32.mrb[0].mxu0
  %769 = vdwg.mxu0
  %770 = vmatprep.subr.mxu0 0.0
  %v771 = vand.u32 %v542, 4294901760
  %772 = vmatpush1.msra.mxu0 %v771
  %773 = vmatprep.subr.mxu0 0.0
  %774 = vmatpush1.msra.mxu0 0.0
  %775 = vmatprep.subr.mxu0 0.0
  %776 = vmatpush1.msra.mxu0 0.0
  %777 = vmatprep.subr.mxu0 0.0
  %778 = vmatpush1.msra.mxu0 0.0
  %779 = vmatprep.subr.mxu0 0.0
  %780 = vmatpush1.msra.mxu0 0.0
  %781 = vmatprep.subr.mxu0 0.0
  %782 = vmatpush1.msra.mxu0 0.0
  %783 = vmatprep.subr.mxu0 0.0
  %784 = vmatpush1.msra.mxu0 0.0
  %785 = vmatprep.subr.mxu0 0.0
  %786 = vmatpush1.msra.mxu0 0.0
  %787 = vmatprep.subr.mxu0 0.0
  %788 = vmatpush1.msra.mxu0 0.0
  %789 = vmatprep.subr.mxu0 0.0
  %790 = vmatpush1.msra.mxu0 0.0
  %791 = vmatprep.subr.mxu0 0.0
  %792 = vmatpush1.msra.mxu0 0.0
  %793 = vmatprep.subr.mxu0 0.0
  %794 = vmatpush1.msra.mxu0 0.0
  %795 = vmatprep.subr.mxu0 0.0
  %796 = vmatpush1.msra.mxu0 0.0
  %797 = vmatprep.subr.mxu0 0.0
  %798 = vmatpush1.msra.mxu0 0.0
  %799 = vmatprep.subr.mxu0 0.0
  %800 = vmatpush1.msra.mxu0 0.0
  %801 = vmatprep.subr.mxu0 0.0
  %802 = vmatpush1.msra.mxu0 0.0
  %803 = vmatprep.subr.mxu0 0.0
  %804 = vmatpush1.msra.mxu0 0.0
  %805 = vmatprep.subr.mxu0 0.0
  %806 = vmatpush1.msra.mxu0 0.0
  %807 = vmatprep.subr.mxu0 0.0
  %808 = vmatpush1.msra.mxu0 0.0
  %809 = vmatprep.subr.mxu0 0.0
  %810 = vmatpush1.msra.mxu0 0.0
  %811 = vmatprep.subr.mxu0 0.0
  %812 = vmatpush1.msra.mxu0 0.0
  %813 = vmatprep.subr.mxu0 0.0
  %814 = vmatpush1.msra.mxu0 0.0
  %815 = vmatprep.subr.mxu0 0.0
  %816 = vmatpush1.msra.mxu0 0.0
  %817 = vmatprep.subr.mxu0 0.0
  %818 = vmatpush1.msra.mxu0 0.0
  %819 = vmatprep.subr.mxu0 0.0
  %820 = vmatpush1.msra.mxu0 0.0
  %821 = vmatprep.subr.mxu0 0.0
  %822 = vmatpush1.msra.mxu0 0.0
  %823 = vmatprep.subr.mxu0 0.0
  %824 = vmatpush1.msra.mxu0 0.0
  %825 = vmatprep.subr.mxu0 0.0
  %826 = vmatpush1.msra.mxu0 0.0
  %827 = vmatprep.subr.mxu0 0.0
  %828 = vmatpush1.msra.mxu0 0.0
  %829 = vmatprep.subr.mxu0 0.0
  %830 = vmatpush1.msra.mxu0 0.0
  %831 = vmatprep.subr.mxu0 0.0
  %832 = vmatpush1.msra.mxu0 0.0
  %833 = vmatprep.subr.mxu0 0.0
  %834 = vmatpush1.msra.mxu0 0.0
  %835 = vmatprep.mubr.f32.mxu0 0.0
  %v836 = vand.u32 %v538, 4294901760
  %v837 = vsub.f32 %v538, %v836
  %v838 = vand.u32 %v837, 4294901760
  %839 = vmatmul.mubr.f32.gmra.mrb[0].mxu0 %v838
  %v840 = vpop.f32.mrb[0].mxu0
  %v841 = vadd.f32 %v767, %v840
  %v842 = vpop.f32.mrb[0].mxu0
  %843 = vdwg.mxu0
  %844 = vmatprep.subr.mxu0 0.0
  %v845 = vand.u32 %v542, 4294901760
  %v846 = vsub.f32 %v542, %v845
  %v847 = vand.u32 %v846, 4294901760
  %848 = vmatpush1.msra.mxu0 %v847
  %849 = vmatprep.subr.mxu0 0.0
  %850 = vmatpush1.msra.mxu0 0.0
  %851 = vmatprep.subr.mxu0 0.0
  %852 = vmatpush1.msra.mxu0 0.0
  %853 = vmatprep.subr.mxu0 0.0
  %854 = vmatpush1.msra.mxu0 0.0
  %855 = vmatprep.subr.mxu0 0.0
  %856 = vmatpush1.msra.mxu0 0.0
  %857 = vmatprep.subr.mxu0 0.0
  %858 = vmatpush1.msra.mxu0 0.0
  %859 = vmatprep.subr.mxu0 0.0
  %860 = vmatpush1.msra.mxu0 0.0
  %861 = vmatprep.subr.mxu0 0.0
  %862 = vmatpush1.msra.mxu0 0.0
  %863 = vmatprep.subr.mxu0 0.0
  %864 = vmatpush1.msra.mxu0 0.0
  %865 = vmatprep.subr.mxu0 0.0
  %866 = vmatpush1.msra.mxu0 0.0
  %867 = vmatprep.subr.mxu0 0.0
  %868 = vmatpush1.msra.mxu0 0.0
  %869 = vmatprep.subr.mxu0 0.0
  %870 = vmatpush1.msra.mxu0 0.0
  %871 = vmatprep.subr.mxu0 0.0
  %872 = vmatpush1.msra.mxu0 0.0
  %873 = vmatprep.subr.mxu0 0.0
  %874 = vmatpush1.msra.mxu0 0.0
  %875 = vmatprep.subr.mxu0 0.0
  %876 = vmatpush1.msra.mxu0 0.0
  %877 = vmatprep.subr.mxu0 0.0
  %878 = vmatpush1.msra.mxu0 0.0
  %879 = vmatprep.subr.mxu0 0.0
  %880 = vmatpush1.msra.mxu0 0.0
  %881 = vmatprep.subr.mxu0 0.0
  %882 = vmatpush1.msra.mxu0 0.0
  %883 = vmatprep.subr.mxu0 0.0
  %884 = vmatpush1.msra.mxu0 0.0
  %885 = vmatprep.subr.mxu0 0.0
  %886 = vmatpush1.msra.mxu0 0.0
  %887 = vmatprep.subr.mxu0 0.0
  %888 = vmatpush1.msra.mxu0 0.0
  %889 = vmatprep.subr.mxu0 0.0
  %890 = vmatpush1.msra.mxu0 0.0
  %891 = vmatprep.subr.mxu0 0.0
  %892 = vmatpush1.msra.mxu0 0.0
  %893 = vmatprep.subr.mxu0 0.0
  %894 = vmatpush1.msra.mxu0 0.0
  %895 = vmatprep.subr.mxu0 0.0
  %896 = vmatpush1.msra.mxu0 0.0
  %897 = vmatprep.subr.mxu0 0.0
  %898 = vmatpush1.msra.mxu0 0.0
  %899 = vmatprep.subr.mxu0 0.0
  %900 = vmatpush1.msra.mxu0 0.0
  %901 = vmatprep.subr.mxu0 0.0
  %902 = vmatpush1.msra.mxu0 0.0
  %903 = vmatprep.subr.mxu0 0.0
  %904 = vmatpush1.msra.mxu0 0.0
  %905 = vmatprep.subr.mxu0 0.0
  %906 = vmatpush1.msra.mxu0 0.0
  %907 = vmatprep.subr.mxu0 0.0
  %908 = vmatpush1.msra.mxu0 0.0
  %909 = vmatprep.subr.mxu0 0.0
  %910 = vmatpush1.msra.mxu0 0.0
  %911 = vmatprep.mubr.f32.mxu0 0.0
  %v912 = vand.u32 %v538, 4294901760
  %913 = vmatmul.mubr.f32.gmra.mrb[0].mxu0 %v912
  %v914 = vpop.f32.mrb[0].mxu0
  %v915 = vadd.f32 %v841, %v914
  %v916 = vpop.f32.mrb[0].mxu0
  %917 = vdwg.mxu0
  %918 = vmatprep.subr.mxu0 0.0
  %v919 = vand.u32 %v542, 4294901760
  %920 = vmatpush1.msra.mxu0 %v919
  %921 = vmatprep.subr.mxu0 0.0
  %922 = vmatpush1.msra.mxu0 0.0
  %923 = vmatprep.subr.mxu0 0.0
  %924 = vmatpush1.msra.mxu0 0.0
  %925 = vmatprep.subr.mxu0 0.0
  %926 = vmatpush1.msra.mxu0 0.0
  %927 = vmatprep.subr.mxu0 0.0
  %928 = vmatpush1.msra.mxu0 0.0
  %929 = vmatprep.subr.mxu0 0.0
  %930 = vmatpush1.msra.mxu0 0.0
  %931 = vmatprep.subr.mxu0 0.0
  %932 = vmatpush1.msra.mxu0 0.0
  %933 = vmatprep.subr.mxu0 0.0
  %934 = vmatpush1.msra.mxu0 0.0
  %935 = vmatprep.subr.mxu0 0.0
  %936 = vmatpush1.msra.mxu0 0.0
  %937 = vmatprep.subr.mxu0 0.0
  %938 = vmatpush1.msra.mxu0 0.0
  %939 = vmatprep.subr.mxu0 0.0
  %940 = vmatpush1.msra.mxu0 0.0
  %941 = vmatprep.subr.mxu0 0.0
  %942 = vmatpush1.msra.mxu0 0.0
  %943 = vmatprep.subr.mxu0 0.0
  %944 = vmatpush1.msra.mxu0 0.0
  %945 = vmatprep.subr.mxu0 0.0
  %946 = vmatpush1.msra.mxu0 0.0
  %947 = vmatprep.subr.mxu0 0.0
  %948 = vmatpush1.msra.mxu0 0.0
  %949 = vmatprep.subr.mxu0 0.0
  %950 = vmatpush1.msra.mxu0 0.0
  %951 = vmatprep.subr.mxu0 0.0
  %952 = vmatpush1.msra.mxu0 0.0
  %953 = vmatprep.subr.mxu0 0.0
  %954 = vmatpush1.msra.mxu0 0.0
  %955 = vmatprep.subr.mxu0 0.0
  %956 = vmatpush1.msra.mxu0 0.0
  %957 = vmatprep.subr.mxu0 0.0
  %958 = vmatpush1.msra.mxu0 0.0
  %959 = vmatprep.subr.mxu0 0.0
  %960 = vmatpush1.msra.mxu0 0.0
  %961 = vmatprep.subr.mxu0 0.0
  %962 = vmatpush1.msra.mxu0 0.0
  %963 = vmatprep.subr.mxu0 0.0
  %964 = vmatpush1.msra.mxu0 0.0
  %965 = vmatprep.subr.mxu0 0.0
  %966 = vmatpush1.msra.mxu0 0.0
  %967 = vmatprep.subr.mxu0 0.0
  %968 = vmatpush1.msra.mxu0 0.0
  %969 = vmatprep.subr.mxu0 0.0
  %970 = vmatpush1.msra.mxu0 0.0
  %971 = vmatprep.subr.mxu0 0.0
  %972 = vmatpush1.msra.mxu0 0.0
  %973 = vmatprep.subr.mxu0 0.0
  %974 = vmatpush1.msra.mxu0 0.0
  %975 = vmatprep.subr.mxu0 0.0
  %976 = vmatpush1.msra.mxu0 0.0
  %977 = vmatprep.subr.mxu0 0.0
  %978 = vmatpush1.msra.mxu0 0.0
  %979 = vmatprep.subr.mxu0 0.0
  %980 = vmatpush1.msra.mxu0 0.0
  %981 = vmatprep.subr.mxu0 0.0
  %982 = vmatpush1.msra.mxu0 0.0
  %983 = vmatprep.mubr.f32.mxu0 0.0
  %v984 = vand.u32 %v538, 4294901760
  %985 = vmatmul.mubr.f32.gmra.mrb[0].mxu0 %v984
  %v986 = vpop.f32.mrb[0].mxu0
  %v987 = vadd.f32 %v915, %v986
  %v988 = vpop.f32.mrb[0].mxu0
  %989 = vdwg.mxu0
  %v990 = vmax.f32 %v987, 0.0
  %v991 = vld [vmem:[%s5] sm:$0x3]
  %v992 = vld [vmem:[%s6] sm:$0x1]
  %v994 = vlaneseq
  %v995 = vshrl.u32 %v994, 7
  %v996 = vsub.s32 0, %v995
  %v997 = vrot.slane %v992, %v996
  %vm999 = vcmask 15360
  %v1001 = vsel %vm999, %v990, 0
  %vm1003 = vcmask 1041408
  %v1005 = vsel %vm1003, %v991, 0
  %1007 = vmatprep.subr.mxu0 0.0
  %v1008 = vand.u32 %v1005, 4294901760
  %1009 = vmatpush1.msra.mxu0 %v1008
  %1010 = vmatprep.subr.mxu0 0.0
  %1011 = vmatpush1.msra.mxu0 0.0
  %1012 = vmatprep.subr.mxu0 0.0
  %1013 = vmatpush1.msra.mxu0 0.0
  %1014 = vmatprep.subr.mxu0 0.0
  %1015 = vmatpush1.msra.mxu0 0.0
  %1016 = vmatprep.subr.mxu0 0.0
  %1017 = vmatpush1.msra.mxu0 0.0
  %1018 = vmatprep.subr.mxu0 0.0
  %1019 = vmatpush1.msra.mxu0 0.0
  %1020 = vmatprep.subr.mxu0 0.0
  %1021 = vmatpush1.msra.mxu0 0.0
  %1022 = vmatprep.subr.mxu0 0.0
  %1023 = vmatpush1.msra.mxu0 0.0
  %1024 = vmatprep.subr.mxu0 0.0
  %1025 = vmatpush1.msra.mxu0 0.0
  %1026 = vmatprep.subr.mxu0 0.0
  %1027 = vmatpush1.msra.mxu0 0.0
  %1028 = vmatprep.subr.mxu0 0.0
  %1029 = vmatpush1.msra.mxu0 0.0
  %1030 = vmatprep.subr.mxu0 0.0
  %1031 = vmatpush1.msra.mxu0 0.0
  %1032 = vmatprep.subr.mxu0 0.0
  %1033 = vmatpush1.msra.mxu0 0.0
  %1034 = vmatprep.subr.mxu0 0.0
  %1035 = vmatpush1.msra.mxu0 0.0
  %1036 = vmatprep.subr.mxu0 0.0
  %1037 = vmatpush1.msra.mxu0 0.0
  %1038 = vmatprep.subr.mxu0 0.0
  %1039 = vmatpush1.msra.mxu0 0.0
  %1040 = vmatprep.subr.mxu0 0.0
  %1041 = vmatpush1.msra.mxu0 0.0
  %1042 = vmatprep.subr.mxu0 0.0
  %1043 = vmatpush1.msra.mxu0 0.0
  %1044 = vmatprep.subr.mxu0 0.0
  %1045 = vmatpush1.msra.mxu0 0.0
  %1046 = vmatprep.subr.mxu0 0.0
  %1047 = vmatpush1.msra.mxu0 0.0
  %1048 = vmatprep.subr.mxu0 0.0
  %1049 = vmatpush1.msra.mxu0 0.0
  %1050 = vmatprep.subr.mxu0 0.0
  %1051 = vmatpush1.msra.mxu0 0.0
  %1052 = vmatprep.subr.mxu0 0.0
  %1053 = vmatpush1.msra.mxu0 0.0
  %1054 = vmatprep.subr.mxu0 0.0
  %1055 = vmatpush1.msra.mxu0 0.0
  %1056 = vmatprep.subr.mxu0 0.0
  %1057 = vmatpush1.msra.mxu0 0.0
  %1058 = vmatprep.subr.mxu0 0.0
  %1059 = vmatpush1.msra.mxu0 0.0
  %1060 = vmatprep.subr.mxu0 0.0
  %1061 = vmatpush1.msra.mxu0 0.0
  %1062 = vmatprep.subr.mxu0 0.0
  %1063 = vmatpush1.msra.mxu0 0.0
  %1064 = vmatprep.subr.mxu0 0.0
  %1065 = vmatpush1.msra.mxu0 0.0
  %1066 = vmatprep.subr.mxu0 0.0
  %1067 = vmatpush1.msra.mxu0 0.0
  %1068 = vmatprep.subr.mxu0 0.0
  %1069 = vmatpush1.msra.mxu0 0.0
  %1070 = vmatprep.subr.mxu0 0.0
  %1071 = vmatpush1.msra.mxu0 0.0
  %1072 = vmatprep.mubr.f32.mxu0 0.0
  %v1073 = vand.u32 %v1001, 4294901760
  %v1074 = vsub.f32 %v1001, %v1073
  %v1075 = vand.u32 %v1074, 4294901760
  %v1076 = vsub.f32 %v1074, %v1075
  %v1077 = vand.u32 %v1076, 4294901760
  %1078 = vmatmul.mubr.f32.gmra.mrb[0].mxu0 %v1077
  %v1079 = vpop.f32.mrb[0].mxu0
  %v1080 = vadd.f32 %v997, %v1079
  %v1081 = vpop.f32.mrb[0].mxu0
  %1082 = vdwg.mxu0
  %1083 = vmatprep.subr.mxu0 0.0
  %v1084 = vand.u32 %v1005, 4294901760
  %v1085 = vsub.f32 %v1005, %v1084
  %v1086 = vand.u32 %v1085, 4294901760
  %v1087 = vsub.f32 %v1085, %v1086
  %v1088 = vand.u32 %v1087, 4294901760
  %1089 = vmatpush1.msra.mxu0 %v1088
  %1090 = vmatprep.subr.mxu0 0.0
  %1091 = vmatpush1.msra.mxu0 0.0
  %1092 = vmatprep.subr.mxu0 0.0
  %1093 = vmatpush1.msra.mxu0 0.0
  %1094 = vmatprep.subr.mxu0 0.0
  %1095 = vmatpush1.msra.mxu0 0.0
  %1096 = vmatprep.subr.mxu0 0.0
  %1097 = vmatpush1.msra.mxu0 0.0
  %1098 = vmatprep.subr.mxu0 0.0
  %1099 = vmatpush1.msra.mxu0 0.0
  %1100 = vmatprep.subr.mxu0 0.0
  %1101 = vmatpush1.msra.mxu0 0.0
  %1102 = vmatprep.subr.mxu0 0.0
  %1103 = vmatpush1.msra.mxu0 0.0
  %1104 = vmatprep.subr.mxu0 0.0
  %1105 = vmatpush1.msra.mxu0 0.0
  %1106 = vmatprep.subr.mxu0 0.0
  %1107 = vmatpush1.msra.mxu0 0.0
  %1108 = vmatprep.subr.mxu0 0.0
  %1109 = vmatpush1.msra.mxu0 0.0
  %1110 = vmatprep.subr.mxu0 0.0
  %1111 = vmatpush1.msra.mxu0 0.0
  %1112 = vmatprep.subr.mxu0 0.0
  %1113 = vmatpush1.msra.mxu0 0.0
  %1114 = vmatprep.subr.mxu0 0.0
  %1115 = vmatpush1.msra.mxu0 0.0
  %1116 = vmatprep.subr.mxu0 0.0
  %1117 = vmatpush1.msra.mxu0 0.0
  %1118 = vmatprep.subr.mxu0 0.0
  %1119 = vmatpush1.msra.mxu0 0.0
  %1120 = vmatprep.subr.mxu0 0.0
  %1121 = vmatpush1.msra.mxu0 0.0
  %1122 = vmatprep.subr.mxu0 0.0
  %1123 = vmatpush1.msra.mxu0 0.0
  %1124 = vmatprep.subr.mxu0 0.0
  %1125 = vmatpush1.msra.mxu0 0.0
  %1126 = vmatprep.subr.mxu0 0.0
  %1127 = vmatpush1.msra.mxu0 0.0
  %1128 = vmatprep.subr.mxu0 0.0
  %1129 = vmatpush1.msra.mxu0 0.0
  %1130 = vmatprep.subr.mxu0 0.0
  %1131 = vmatpush1.msra.mxu0 0.0
  %1132 = vmatprep.subr.mxu0 0.0
  %1133 = vmatpush1.msra.mxu0 0.0
  %1134 = vmatprep.subr.mxu0 0.0
  %1135 = vmatpush1.msra.mxu0 0.0
  %1136 = vmatprep.subr.mxu0 0.0
  %1137 = vmatpush1.msra.mxu0 0.0
  %1138 = vmatprep.subr.mxu0 0.0
  %1139 = vmatpush1.msra.mxu0 0.0
  %1140 = vmatprep.subr.mxu0 0.0
  %1141 = vmatpush1.msra.mxu0 0.0
  %1142 = vmatprep.subr.mxu0 0.0
  %1143 = vmatpush1.msra.mxu0 0.0
  %1144 = vmatprep.subr.mxu0 0.0
  %1145 = vmatpush1.msra.mxu0 0.0
  %1146 = vmatprep.subr.mxu0 0.0
  %1147 = vmatpush1.msra.mxu0 0.0
  %1148 = vmatprep.subr.mxu0 0.0
  %1149 = vmatpush1.msra.mxu0 0.0
  %1150 = vmatprep.subr.mxu0 0.0
  %1151 = vmatpush1.msra.mxu0 0.0
  %1152 = vmatprep.mubr.f32.mxu0 0.0
  %v1153 = vand.u32 %v1001, 4294901760
  %1154 = vmatmul.mubr.f32.gmra.mrb[0].mxu0 %v1153
  %v1155 = vpop.f32.mrb[0].mxu0
  %v1156 = vadd.f32 %v1080, %v1155
  %v1157 = vpop.f32.mrb[0].mxu0
  %1158 = vdwg.mxu0
  %1159 = vmatprep.subr.mxu0 0.0
  %v1160 = vand.u32 %v1005, 4294901760
  %v1161 = vsub.f32 %v1005, %v1160
  %1162 = vmatpush1.msra.mxu0 %v1161
  %1163 = vmatprep.subr.mxu0 0.0
  %1164 = vmatpush1.msra.mxu0 0.0
  %1165 = vmatprep.subr.mxu0 0.0
  %1166 = vmatpush1.msra.mxu0 0.0
  %1167 = vmatprep.subr.mxu0 0.0
  %1168 = vmatpush1.msra.mxu0 0.0
  %1169 = vmatprep.subr.mxu0 0.0
  %1170 = vmatpush1.msra.mxu0 0.0
  %1171 = vmatprep.subr.mxu0 0.0
  %1172 = vmatpush1.msra.mxu0 0.0
  %1173 = vmatprep.subr.mxu0 0.0
  %1174 = vmatpush1.msra.mxu0 0.0
  %1175 = vmatprep.subr.mxu0 0.0
  %1176 = vmatpush1.msra.mxu0 0.0
  %1177 = vmatprep.subr.mxu0 0.0
  %1178 = vmatpush1.msra.mxu0 0.0
  %1179 = vmatprep.subr.mxu0 0.0
  %1180 = vmatpush1.msra.mxu0 0.0
  %1181 = vmatprep.subr.mxu0 0.0
  %1182 = vmatpush1.msra.mxu0 0.0
  %1183 = vmatprep.subr.mxu0 0.0
  %1184 = vmatpush1.msra.mxu0 0.0
  %1185 = vmatprep.subr.mxu0 0.0
  %1186 = vmatpush1.msra.mxu0 0.0
  %1187 = vmatprep.subr.mxu0 0.0
  %1188 = vmatpush1.msra.mxu0 0.0
  %1189 = vmatprep.subr.mxu0 0.0
  %1190 = vmatpush1.msra.mxu0 0.0
  %1191 = vmatprep.subr.mxu0 0.0
  %1192 = vmatpush1.msra.mxu0 0.0
  %1193 = vmatprep.subr.mxu0 0.0
  %1194 = vmatpush1.msra.mxu0 0.0
  %1195 = vmatprep.subr.mxu0 0.0
  %1196 = vmatpush1.msra.mxu0 0.0
  %1197 = vmatprep.subr.mxu0 0.0
  %1198 = vmatpush1.msra.mxu0 0.0
  %1199 = vmatprep.subr.mxu0 0.0
  %1200 = vmatpush1.msra.mxu0 0.0
  %1201 = vmatprep.subr.mxu0 0.0
  %1202 = vmatpush1.msra.mxu0 0.0
  %1203 = vmatprep.subr.mxu0 0.0
  %1204 = vmatpush1.msra.mxu0 0.0
  %1205 = vmatprep.subr.mxu0 0.0
  %1206 = vmatpush1.msra.mxu0 0.0
  %1207 = vmatprep.subr.mxu0 0.0
  %1208 = vmatpush1.msra.mxu0 0.0
  %1209 = vmatprep.subr.mxu0 0.0
  %1210 = vmatpush1.msra.mxu0 0.0
  %1211 = vmatprep.subr.mxu0 0.0
  %1212 = vmatpush1.msra.mxu0 0.0
  %1213 = vmatprep.subr.mxu0 0.0
  %1214 = vmatpush1.msra.mxu0 0.0
  %1215 = vmatprep.subr.mxu0 0.0
  %1216 = vmatpush1.msra.mxu0 0.0
  %1217 = vmatprep.subr.mxu0 0.0
  %1218 = vmatpush1.msra.mxu0 0.0
  %1219 = vmatprep.subr.mxu0 0.0
  %1220 = vmatpush1.msra.mxu0 0.0
  %1221 = vmatprep.subr.mxu0 0.0
  %1222 = vmatpush1.msra.mxu0 0.0
  %1223 = vmatprep.subr.mxu0 0.0
  %1224 = vmatpush1.msra.mxu0 0.0
  %1225 = vmatprep.mubr.f32.mxu0 0.0
  %v1226 = vand.u32 %v1001, 4294901760
  %v1227 = vsub.f32 %v1001, %v1226
  %1228 = vmatmul.mubr.f32.gmra.mrb[0].mxu0 %v1227
  %v1229 = vpop.f32.mrb[0].mxu0
  %v1230 = vadd.f32 %v1156, %v1229
  %v1231 = vpop.f32.mrb[0].mxu0
  %1232 = vdwg.mxu0
  %1233 = vmatprep.subr.mxu0 0.0
  %v1234 = vand.u32 %v1005, 4294901760
  %1235 = vmatpush1.msra.mxu0 %v1234
  %1236 = vmatprep.subr.mxu0 0.0
  %1237 = vmatpush1.msra.mxu0 0.0
  %1238 = vmatprep.subr.mxu0 0.0
  %1239 = vmatpush1.msra.mxu0 0.0
  %1240 = vmatprep.subr.mxu0 0.0
  %1241 = vmatpush1.msra.mxu0 0.0
  %1242 = vmatprep.subr.mxu0 0.0
  %1243 = vmatpush1.msra.mxu0 0.0
  %1244 = vmatprep.subr.mxu0 0.0
  %1245 = vmatpush1.msra.mxu0 0.0
  %1246 = vmatprep.subr.mxu0 0.0
  %1247 = vmatpush1.msra.mxu0 0.0
  %1248 = vmatprep.subr.mxu0 0.0
  %1249 = vmatpush1.msra.mxu0 0.0
  %1250 = vmatprep.subr.mxu0 0.0
  %1251 = vmatpush1.msra.mxu0 0.0
  %1252 = vmatprep.subr.mxu0 0.0
  %1253 = vmatpush1.msra.mxu0 0.0
  %1254 = vmatprep.subr.mxu0 0.0
  %1255 = vmatpush1.msra.mxu0 0.0
  %1256 = vmatprep.subr.mxu0 0.0
  %1257 = vmatpush1.msra.mxu0 0.0
  %1258 = vmatprep.subr.mxu0 0.0
  %1259 = vmatpush1.msra.mxu0 0.0
  %1260 = vmatprep.subr.mxu0 0.0
  %1261 = vmatpush1.msra.mxu0 0.0
  %1262 = vmatprep.subr.mxu0 0.0
  %1263 = vmatpush1.msra.mxu0 0.0
  %1264 = vmatprep.subr.mxu0 0.0
  %1265 = vmatpush1.msra.mxu0 0.0
  %1266 = vmatprep.subr.mxu0 0.0
  %1267 = vmatpush1.msra.mxu0 0.0
  %1268 = vmatprep.subr.mxu0 0.0
  %1269 = vmatpush1.msra.mxu0 0.0
  %1270 = vmatprep.subr.mxu0 0.0
  %1271 = vmatpush1.msra.mxu0 0.0
  %1272 = vmatprep.subr.mxu0 0.0
  %1273 = vmatpush1.msra.mxu0 0.0
  %1274 = vmatprep.subr.mxu0 0.0
  %1275 = vmatpush1.msra.mxu0 0.0
  %1276 = vmatprep.subr.mxu0 0.0
  %1277 = vmatpush1.msra.mxu0 0.0
  %1278 = vmatprep.subr.mxu0 0.0
  %1279 = vmatpush1.msra.mxu0 0.0
  %1280 = vmatprep.subr.mxu0 0.0
  %1281 = vmatpush1.msra.mxu0 0.0
  %1282 = vmatprep.subr.mxu0 0.0
  %1283 = vmatpush1.msra.mxu0 0.0
  %1284 = vmatprep.subr.mxu0 0.0
  %1285 = vmatpush1.msra.mxu0 0.0
  %1286 = vmatprep.subr.mxu0 0.0
  %1287 = vmatpush1.msra.mxu0 0.0
  %1288 = vmatprep.subr.mxu0 0.0
  %1289 = vmatpush1.msra.mxu0 0.0
  %1290 = vmatprep.subr.mxu0 0.0
  %1291 = vmatpush1.msra.mxu0 0.0
  %1292 = vmatprep.subr.mxu0 0.0
  %1293 = vmatpush1.msra.mxu0 0.0
  %1294 = vmatprep.subr.mxu0 0.0
  %1295 = vmatpush1.msra.mxu0 0.0
  %1296 = vmatprep.subr.mxu0 0.0
  %1297 = vmatpush1.msra.mxu0 0.0
  %1298 = vmatprep.mubr.f32.mxu0 0.0
  %v1299 = vand.u32 %v1001, 4294901760
  %v1300 = vsub.f32 %v1001, %v1299
  %v1301 = vand.u32 %v1300, 4294901760
  %1302 = vmatmul.mubr.f32.gmra.mrb[0].mxu0 %v1301
  %v1303 = vpop.f32.mrb[0].mxu0
  %v1304 = vadd.f32 %v1230, %v1303
  %v1305 = vpop.f32.mrb[0].mxu0
  %1306 = vdwg.mxu0
  %1307 = vmatprep.subr.mxu0 0.0
  %v1308 = vand.u32 %v1005, 4294901760
  %v1309 = vsub.f32 %v1005, %v1308
  %v1310 = vand.u32 %v1309, 4294901760
  %1311 = vmatpush1.msra.mxu0 %v1310
  %1312 = vmatprep.subr.mxu0 0.0
  %1313 = vmatpush1.msra.mxu0 0.0
  %1314 = vmatprep.subr.mxu0 0.0
  %1315 = vmatpush1.msra.mxu0 0.0
  %1316 = vmatprep.subr.mxu0 0.0
  %1317 = vmatpush1.msra.mxu0 0.0
  %1318 = vmatprep.subr.mxu0 0.0
  %1319 = vmatpush1.msra.mxu0 0.0
  %1320 = vmatprep.subr.mxu0 0.0
  %1321 = vmatpush1.msra.mxu0 0.0
  %1322 = vmatprep.subr.mxu0 0.0
  %1323 = vmatpush1.msra.mxu0 0.0
  %1324 = vmatprep.subr.mxu0 0.0
  %1325 = vmatpush1.msra.mxu0 0.0
  %1326 = vmatprep.subr.mxu0 0.0
  %1327 = vmatpush1.msra.mxu0 0.0
  %1328 = vmatprep.subr.mxu0 0.0
  %1329 = vmatpush1.msra.mxu0 0.0
  %1330 = vmatprep.subr.mxu0 0.0
  %1331 = vmatpush1.msra.mxu0 0.0
  %1332 = vmatprep.subr.mxu0 0.0
  %1333 = vmatpush1.msra.mxu0 0.0
  %1334 = vmatprep.subr.mxu0 0.0
  %1335 = vmatpush1.msra.mxu0 0.0
  %1336 = vmatprep.subr.mxu0 0.0
  %1337 = vmatpush1.msra.mxu0 0.0
  %1338 = vmatprep.subr.mxu0 0.0
  %1339 = vmatpush1.msra.mxu0 0.0
  %1340 = vmatprep.subr.mxu0 0.0
  %1341 = vmatpush1.msra.mxu0 0.0
  %1342 = vmatprep.subr.mxu0 0.0
  %1343 = vmatpush1.msra.mxu0 0.0
  %1344 = vmatprep.subr.mxu0 0.0
  %1345 = vmatpush1.msra.mxu0 0.0
  %1346 = vmatprep.subr.mxu0 0.0
  %1347 = vmatpush1.msra.mxu0 0.0
  %1348 = vmatprep.subr.mxu0 0.0
  %1349 = vmatpush1.msra.mxu0 0.0
  %1350 = vmatprep.subr.mxu0 0.0
  %1351 = vmatpush1.msra.mxu0 0.0
  %1352 = vmatprep.subr.mxu0 0.0
  %1353 = vmatpush1.msra.mxu0 0.0
  %1354 = vmatprep.subr.mxu0 0.0
  %1355 = vmatpush1.msra.mxu0 0.0
  %1356 = vmatprep.subr.mxu0 0.0
  %1357 = vmatpush1.msra.mxu0 0.0
  %1358 = vmatprep.subr.mxu0 0.0
  %1359 = vmatpush1.msra.mxu0 0.0
  %1360 = vmatprep.subr.mxu0 0.0
  %1361 = vmatpush1.msra.mxu0 0.0
  %1362 = vmatprep.subr.mxu0 0.0
  %1363 = vmatpush1.msra.mxu0 0.0
  %1364 = vmatprep.subr.mxu0 0.0
  %1365 = vmatpush1.msra.mxu0 0.0
  %1366 = vmatprep.subr.mxu0 0.0
  %1367 = vmatpush1.msra.mxu0 0.0
  %1368 = vmatprep.subr.mxu0 0.0
  %1369 = vmatpush1.msra.mxu0 0.0
  %1370 = vmatprep.subr.mxu0 0.0
  %1371 = vmatpush1.msra.mxu0 0.0
  %1372 = vmatprep.subr.mxu0 0.0
  %1373 = vmatpush1.msra.mxu0 0.0
  %1374 = vmatprep.mubr.f32.mxu0 0.0
  %v1375 = vand.u32 %v1001, 4294901760
  %1376 = vmatmul.mubr.f32.gmra.mrb[0].mxu0 %v1375
  %v1377 = vpop.f32.mrb[0].mxu0
  %v1378 = vadd.f32 %v1304, %v1377
  %v1379 = vpop.f32.mrb[0].mxu0
  %1380 = vdwg.mxu0
  %1381 = vmatprep.subr.mxu0 0.0
  %v1382 = vand.u32 %v1005, 4294901760
  %1383 = vmatpush1.msra.mxu0 %v1382
  %1384 = vmatprep.subr.mxu0 0.0
  %1385 = vmatpush1.msra.mxu0 0.0
  %1386 = vmatprep.subr.mxu0 0.0
  %1387 = vmatpush1.msra.mxu0 0.0
  %1388 = vmatprep.subr.mxu0 0.0
  %1389 = vmatpush1.msra.mxu0 0.0
  %1390 = vmatprep.subr.mxu0 0.0
  %1391 = vmatpush1.msra.mxu0 0.0
  %1392 = vmatprep.subr.mxu0 0.0
  %1393 = vmatpush1.msra.mxu0 0.0
  %1394 = vmatprep.subr.mxu0 0.0
  %1395 = vmatpush1.msra.mxu0 0.0
  %1396 = vmatprep.subr.mxu0 0.0
  %1397 = vmatpush1.msra.mxu0 0.0
  %1398 = vmatprep.subr.mxu0 0.0
  %1399 = vmatpush1.msra.mxu0 0.0
  %1400 = vmatprep.subr.mxu0 0.0
  %1401 = vmatpush1.msra.mxu0 0.0
  %1402 = vmatprep.subr.mxu0 0.0
  %1403 = vmatpush1.msra.mxu0 0.0
  %1404 = vmatprep.subr.mxu0 0.0
  %1405 = vmatpush1.msra.mxu0 0.0
  %1406 = vmatprep.subr.mxu0 0.0
  %1407 = vmatpush1.msra.mxu0 0.0
  %1408 = vmatprep.subr.mxu0 0.0
  %1409 = vmatpush1.msra.mxu0 0.0
  %1410 = vmatprep.subr.mxu0 0.0
  %1411 = vmatpush1.msra.mxu0 0.0
  %1412 = vmatprep.subr.mxu0 0.0
  %1413 = vmatpush1.msra.mxu0 0.0
  %1414 = vmatprep.subr.mxu0 0.0
  %1415 = vmatpush1.msra.mxu0 0.0
  %1416 = vmatprep.subr.mxu0 0.0
  %1417 = vmatpush1.msra.mxu0 0.0
  %1418 = vmatprep.subr.mxu0 0.0
  %1419 = vmatpush1.msra.mxu0 0.0
  %1420 = vmatprep.subr.mxu0 0.0
  %1421 = vmatpush1.msra.mxu0 0.0
  %1422 = vmatprep.subr.mxu0 0.0
  %1423 = vmatpush1.msra.mxu0 0.0
  %1424 = vmatprep.subr.mxu0 0.0
  %1425 = vmatpush1.msra.mxu0 0.0
  %1426 = vmatprep.subr.mxu0 0.0
  %1427 = vmatpush1.msra.mxu0 0.0
  %1428 = vmatprep.subr.mxu0 0.0
  %1429 = vmatpush1.msra.mxu0 0.0
  %1430 = vmatprep.subr.mxu0 0.0
  %1431 = vmatpush1.msra.mxu0 0.0
  %1432 = vmatprep.subr.mxu0 0.0
  %1433 = vmatpush1.msra.mxu0 0.0
  %1434 = vmatprep.subr.mxu0 0.0
  %1435 = vmatpush1.msra.mxu0 0.0
  %1436 = vmatprep.subr.mxu0 0.0
  %1437 = vmatpush1.msra.mxu0 0.0
  %1438 = vmatprep.subr.mxu0 0.0
  %1439 = vmatpush1.msra.mxu0 0.0
  %1440 = vmatprep.subr.mxu0 0.0
  %1441 = vmatpush1.msra.mxu0 0.0
  %1442 = vmatprep.subr.mxu0 0.0
  %1443 = vmatpush1.msra.mxu0 0.0
  %1444 = vmatprep.subr.mxu0 0.0
  %1445 = vmatpush1.msra.mxu0 0.0
  %1446 = vmatprep.mubr.f32.mxu0 0.0
  %v1447 = vand.u32 %v1001, 4294901760
  %1448 = vmatmul.mubr.f32.gmra.mrb[0].mxu0 %v1447
  %v1449 = vpop.f32.mrb[0].mxu0
  %v1450 = vadd.f32 %v1378, %v1449
  %v1451 = vpop.f32.mrb[0].mxu0
  %1452 = vdwg.mxu0
  %1453 = vst.msk [vmem:[%s7] sm:$0xff] %vm999, %v1450
  // Predicated region
  $region30: #{tpu_custom_call.1} parent=0 // pred_check
    _
  $region31: #{tpu_custom_call.1} parent=0 // pred_check_branch
    %1455 = sbr.rel (0) target = $region33
  $region32: #{tpu_custom_call.1} parent=0 // pred_region
    _
  $region33: #{tpu_custom_call.1} parent=0 // pred_fallthru
    _
  // Predicated region
  $region34: #{tpu_custom_call.1} parent=0 // pred_check
    _
  $region35: #{tpu_custom_call.1} parent=0 // pred_check_branch
    %1457 = sbr.rel (0) target = $region37
  $region36: #{tpu_custom_call.1} parent=0 // pred_region
    _
  $region37: #{tpu_custom_call.1} parent=0 // pred_fallthru
    _

</llo_original>
